<compile_context>
chip_gen: v5e
topology: v5e:2x2
jax: 0.10.0
libtpu: 0.0.40
codegen_flags: <defaults>
</compile_context>

<pallas_src>
import functools
import jax
import jax.numpy as jnp
from jax.experimental import pallas as pl
from jax.experimental.pallas import tpu as pltpu


# ----------------------------- Pallas kernel -------------------------------
def disc_kernel(ids_ref, emb_ref, wih0_ref, b0_ref, wbig_ref,
                brz1_ref, bin1_ref, bhn1_ref, bhn0_ref,
                linw_ref, linb_ref,
                loss_ref, rew_ref,
                *, T, B, H, target):
    V = emb_ref.shape[0]
    TB = T * B
    H2, H3, H4, H6, H7 = 2 * H, 3 * H, 4 * H, 6 * H, 7 * H

    # ---- embedding lookup fused with layer-0 input projection (off-chain) ----
    # one_hot(ids) @ (embedding @ Wih0_packed) replaces gather + per-step input
    # matmuls; kept in f32 since it is not on the serial chain.
    # TODO(synk): for large vocab replace the one-hot path with a
    # scalar-prefetch / DMA row gather of embedding rows.
    ids = ids_ref[...]                                            # (T*B, 1) int32
    iota = jax.lax.broadcasted_iota(jnp.int32, (TB, V), 1)
    onehot = (ids == iota).astype(jnp.float32)                    # (T*B, V)
    w0x = jnp.dot(emb_ref[...], wih0_ref[...],
                  preferred_element_type=jnp.float32)             # (V, 3H)
    # b0 already contains bih0 (all gates) + bhh0 (r,z gates only).
    xp0 = (jnp.dot(onehot, w0x, preferred_element_type=jnp.float32)
           + b0_ref[...])                                         # (T*B, 3H)

    # ---- hoisted weights / pre-broadcast biases (no per-step rebroadcast) ----
    wbig = wbig_ref[...]                                          # (2H, 7H) bf16
    brz1 = jnp.broadcast_to(brz1_ref[...], (B, H2))               # bih1+bhh1 (r,z)
    bin1 = jnp.broadcast_to(bin1_ref[...], (B, H))                # bih1 (n)
    bhn1 = jnp.broadcast_to(bhn1_ref[...], (B, H))                # bhh1 (n)
    bhn0 = jnp.broadcast_to(bhn0_ref[...], (B, H))                # bhh0 (n)

    # ---- prologue: layer-0 step 0 with h0_prev = 0 (no matmul needed) ----
    gx = xp0[0:B, :]
    rz0 = jax.nn.sigmoid(gx[:, :H2])
    n0 = jnp.tanh(gx[:, H2:H3] + rz0[:, :H] * bhn0)
    h0 = (1.0 - rz0[:, H:H2]) * n0
    h1 = jnp.zeros((B, H), jnp.float32)

    # ---- fused recurrence: one bf16 MXU push per time step drives BOTH the
    #      layer-1 update at step t and layer-0's hidden projection for t+1 ----
    for t in range(T):                                            # T static, small
        hcat = jnp.concatenate([h0, h1], axis=1).astype(jnp.bfloat16)   # (B, 2H)
        big = jnp.dot(hcat, wbig, preferred_element_type=jnp.float32)   # (B, 7H)
        # column blocks: [r1+z1 (summed x/h) | n1_x | n1_h | r0z0_h | n0_h]

        # layer-1 GRU cell (gate order r, z, n; n keeps x/h paths separate)
        rz1 = jax.nn.sigmoid(big[:, :H2] + brz1)
        n1 = jnp.tanh(big[:, H2:H3] + bin1
                      + rz1[:, :H] * (big[:, H3:H4] + bhn1))
        h1 = (1.0 - rz1[:, H:H2]) * n1 + rz1[:, H:H2] * h1

        if t + 1 < T:
            # layer-0 GRU cell for step t+1 (independent of the h1 update above,
            # so its EUP/VPU work overlaps with it)
            gx = xp0[(t + 1) * B:(t + 2) * B, :]
            rz0 = jax.nn.sigmoid(gx[:, :H2] + big[:, H4:H6])
            n0 = jnp.tanh(gx[:, H2:H3]
                          + rz0[:, :H] * (big[:, H6:H7] + bhn0))
            h0 = (1.0 - rz0[:, H:H2]) * n0 + rz0[:, H:H2] * h0

    # ---- Linear head on VPU/XLU (no MXU round trip for a 1-lane output) ----
    logits = (jnp.sum(h1 * jnp.broadcast_to(linw_ref[...], (B, H)),
                      axis=-1, keepdims=True)
              + linb_ref[...])                                    # (B, 1)

    # BCEWithLogitsLoss (mean) + sigmoid rewards
    bce = (jnp.maximum(logits, 0.0) - logits * target
           + jnp.log(1.0 + jnp.exp(-jnp.abs(logits))))
    loss_ref[...] = jnp.mean(bce, keepdims=True)                  # (1, 1)
    rew_ref[...] = jax.nn.sigmoid(logits)                         # (B, 1)


# ------------------------------- wrapper ------------------------------------
def _pack_w(w):   # (3, in, H) -> (in, 3H), gate order (r, z, n) preserved
    return jnp.transpose(w, (1, 0, 2)).reshape(w.shape[1], 3 * w.shape[2])


def _pack_b(b):   # (3, 1, H) -> (1, 3H)
    return jnp.transpose(b, (1, 0, 2)).reshape(1, 3 * b.shape[2])


@functools.partial(jax.jit, static_argnames=("target_type",))
def discriminator_forward(kph_padded, target_type, params):
    """Mirrors Discriminator.forward for already-padded int token ids (B, T)."""
    B, T = kph_padded.shape
    H = params["whh0"].shape[-1]
    target = 0.9 if target_type == 1 else 0.0          # baked into kernel trace

    # time-major flat token ids: row t*B + b == token (batch b, step t)
    ids = jnp.transpose(kph_padded).reshape(T * B, 1).astype(jnp.int32)

    wih0p, whh0p = _pack_w(params["wih0"]), _pack_w(params["whh0"])
    wih1p, whh1p = _pack_w(params["wih1"]), _pack_w(params["whh1"])
    bih0p, bhh0p = _pack_b(params["bih0"]), _pack_b(params["bhh0"])
    bih1p, bhh1p = _pack_b(params["bih1"]), _pack_b(params["bhh1"])

    # layer-0: fold bih0 (all gates) + bhh0 (r,z only) into one precompute bias
    b0 = jnp.concatenate([bih0p[:, :2 * H] + bhh0p[:, :2 * H],
                          bih0p[:, 2 * H:]], axis=1)              # (1, 3H)
    bhn0 = bhh0p[:, 2 * H:]                                       # (1, H)
    # layer-1: r/z biases fully summed; n-gate biases kept split (x vs h path)
    brz1 = bih1p[:, :2 * H] + bhh1p[:, :2 * H]                    # (1, 2H)
    bin1 = bih1p[:, 2 * H:]                                       # (1, H)
    bhn1 = bhh1p[:, 2 * H:]                                       # (1, H)

    # fused recurrence weight: [h0, h1] @ Wbig ->
    #   [ r1+z1 (x/h summed) | n1 x-path | n1 h-path | r0z0 h-path | n0 h-path ]
    zH = jnp.zeros((H, H), jnp.float32)
    w1_top = jnp.concatenate([wih1p[:, :2 * H], wih1p[:, 2 * H:], zH], axis=1)
    w1_bot = jnp.concatenate([whh1p[:, :2 * H], zH, whh1p[:, 2 * H:]], axis=1)
    wbig = jnp.concatenate(
        [jnp.concatenate([w1_top, whh0p], axis=1),
         jnp.concatenate([w1_bot, jnp.zeros((H, 3 * H), jnp.float32)], axis=1)],
        axis=0).astype(jnp.bfloat16)                              # (2H, 7H) bf16

    linw_row = params["linw"].reshape(1, H).astype(jnp.float32)   # (1, H)
    linb = params["linb"].astype(jnp.float32)                     # (1, 1)

    vmem = pl.BlockSpec(memory_space=pltpu.MemorySpace.VMEM)
    kernel = functools.partial(disc_kernel, T=T, B=B, H=H, target=target)

    loss, rewards = pl.pallas_call(
        kernel,
        out_shape=(jax.ShapeDtypeStruct((1, 1), jnp.float32),
                   jax.ShapeDtypeStruct((B, 1), jnp.float32)),
        in_specs=[vmem] * 11,
        out_specs=(vmem, vmem),
    )(ids, params["embedding"].astype(jnp.float32), wih0p, b0, wbig,
      brz1, bin1, bhn1, bhn0, linw_row, linb)

    return loss[0, 0], rewards[:, 0]


# --------------------------- pure-JAX reference ------------------------------
def reference_forward(kph_padded, target_type, params):
    emb = params["embedding"][kph_padded]
    x = jnp.transpose(emb, (1, 0, 2)).astype(jnp.float32)

    def gru_layer(x_seq, wih, whh, bih, bhh):
        B = x_seq.shape[1]
        H = whh.shape[-1]

        def step(h, x_t):
            r = jax.nn.sigmoid(x_t @ wih[0] + bih[0] + h @ whh[0] + bhh[0])
            z = jax.nn.sigmoid(x_t @ wih[1] + bih[1] + h @ whh[1] + bhh[1])
            n = jnp.tanh(x_t @ wih[2] + bih[2] + r * (h @ whh[2] + bhh[2]))
            h_new = (1.0 - z) * n + z * h
            return h_new, h_new

        h_last, ys = jax.lax.scan(step, jnp.zeros((B, H), jnp.float32), x_seq)
        return ys, h_last

    y0, _ = gru_layer(x, params["wih0"], params["whh0"],
                      params["bih0"], params["bhh0"])
    _, h1 = gru_layer(y0, params["wih1"], params["whh1"],
                      params["bih1"], params["bhh1"])
    logits = (h1 @ params["linw"] + params["linb"])[:, 0]
    y = 0.9 if target_type == 1 else 0.0
    loss = jnp.mean(jnp.maximum(logits, 0.0) - logits * y
                    + jnp.log(1.0 + jnp.exp(-jnp.abs(logits))))
    return loss, jax.nn.sigmoid(logits)


# ---------------------------------- main -------------------------------------
if __name__ == "__main__":
    V, E, H, T, B = 32, 32, 32, 8, 8          # vocab, embed, hidden, seq, batch
    PAD_IDX = 0

    key = jax.random.PRNGKey(0)
    ks = jax.random.split(key, 12)
    scale = 1.0 / (H ** 0.5)

    def u(kk, shape):
        return jax.random.uniform(kk, shape, jnp.float32, -scale, scale)

    params = dict(
        embedding=0.1 * jax.random.normal(ks[0], (V, E), jnp.float32),
        wih0=u(ks[1], (3, E, H)), whh0=u(ks[2], (3, H, H)),
        bih0=u(ks[3], (3, 1, H)), bhh0=u(ks[4], (3, 1, H)),
        wih1=u(ks[5], (3, H, H)), whh1=u(ks[6], (3, H, H)),
        bih1=u(ks[7], (3, 1, H)), bhh1=u(ks[8], (3, 1, H)),
        linw=u(ks[9], (H, 1)), linb=u(ks[10], (1, 1)),
    )

    # Variable-length keyphrase sequences padded with pad_idx (padded_all()).
    kph = jax.random.randint(ks[11], (B, T), 1, V)
    lengths = jnp.array([T, T - 1, T - 2, T - 3, T, T - 1, 5, 3])
    mask = jnp.arange(T)[None, :] < lengths[:, None]
    kph = jnp.where(mask, kph, PAD_IDX)

    target_type = 1
    loss, rewards = discriminator_forward(kph, target_type, params)
    jax.block_until_ready((loss, rewards))

    ref_loss, ref_rewards = reference_forward(kph, target_type, params)
    assert jnp.allclose(loss, ref_loss, atol=1e-3, rtol=1e-3), (loss, ref_loss)
    assert jnp.allclose(rewards, ref_rewards, atol=1e-3, rtol=1e-3)
    assert rewards.shape == (B,)

    print("KERNEL_OK")
</pallas_src>

<mosaic_0001>
module attributes {stable_mosaic.version = 11 : i64} {
  func.func @disc_kernel(%arg0: memref<64x1xi32, #tpu.memory_space<vmem>>, %arg1: memref<32x32xf32, #tpu.memory_space<vmem>>, %arg2: memref<32x96xf32, #tpu.memory_space<vmem>>, %arg3: memref<1x96xf32, #tpu.memory_space<vmem>>, %arg4: memref<64x224xbf16, #tpu.memory_space<vmem>>, %arg5: memref<1x64xf32, #tpu.memory_space<vmem>>, %arg6: memref<1x32xf32, #tpu.memory_space<vmem>>, %arg7: memref<1x32xf32, #tpu.memory_space<vmem>>, %arg8: memref<1x32xf32, #tpu.memory_space<vmem>>, %arg9: memref<1x32xf32, #tpu.memory_space<vmem>>, %arg10: memref<1x1xf32, #tpu.memory_space<vmem>>, %arg11: memref<1x1xf32, #tpu.memory_space<vmem>>, %arg12: memref<8x1xf32, #tpu.memory_space<vmem>>) attributes {dimension_semantics = [], scalar_prefetch = 0 : i64, scratch_operands = 0 : i64, tpu.core_type = #tpu.core_type<tc>} {
    %c0 = arith.constant 0 : index
    %c0_0 = arith.constant 0 : index
    %0 = vector.load %arg0[%c0, %c0_0] : memref<64x1xi32, #tpu.memory_space<vmem>>, vector<64x1xi32>
    %1 = tpu.iota {dimensions = array<i32: 1>} : vector<64x32xi32>
    %2 = vector.broadcast %0 : vector<64x1xi32> to vector<64x32xi32>
    %3 = arith.cmpi eq, %2, %1 : vector<64x32xi32>
    %4 = arith.extui %3 : vector<64x32xi1> to vector<64x32xi32>
    %5 = arith.sitofp %4 : vector<64x32xi32> to vector<64x32xf32>
    %c0_1 = arith.constant 0 : index
    %c0_2 = arith.constant 0 : index
    %6 = vector.load %arg1[%c0_1, %c0_2] : memref<32x32xf32, #tpu.memory_space<vmem>>, vector<32x32xf32>
    %c0_3 = arith.constant 0 : index
    %c0_4 = arith.constant 0 : index
    %7 = vector.load %arg2[%c0_3, %c0_4] : memref<32x96xf32, #tpu.memory_space<vmem>>, vector<32x96xf32>
    %cst = arith.constant dense<0.000000e+00> : vector<32x96xf32>
    %8 = tpu.matmul %6, %7, %cst {dimension_numbers = #tpu.dot_dimension_numbers<[1], [0], [0], [1], [0, 0, 1, 1], [], []>} : vector<32x32xf32>, vector<32x96xf32>, vector<32x96xf32> -> vector<32x96xf32>
    %cst_5 = arith.constant dense<0.000000e+00> : vector<64x96xf32>
    %9 = tpu.matmul %5, %8, %cst_5 {dimension_numbers = #tpu.dot_dimension_numbers<[1], [0], [0], [1], [0, 0, 1, 1], [], []>} : vector<64x32xf32>, vector<32x96xf32>, vector<64x96xf32> -> vector<64x96xf32>
    %c0_6 = arith.constant 0 : index
    %c0_7 = arith.constant 0 : index
    %10 = vector.load %arg3[%c0_6, %c0_7] : memref<1x96xf32, #tpu.memory_space<vmem>>, vector<1x96xf32>
    %11 = vector.broadcast %10 : vector<1x96xf32> to vector<64x96xf32>
    %12 = arith.addf %9, %11 : vector<64x96xf32>
    %c0_8 = arith.constant 0 : index
    %c0_9 = arith.constant 0 : index
    %13 = vector.load %arg4[%c0_8, %c0_9] : memref<64x224xbf16, #tpu.memory_space<vmem>>, vector<64x224xbf16>
    %c0_10 = arith.constant 0 : index
    %c0_11 = arith.constant 0 : index
    %14 = vector.load %arg5[%c0_10, %c0_11] : memref<1x64xf32, #tpu.memory_space<vmem>>, vector<1x64xf32>
    %15 = vector.shape_cast %14 : vector<1x64xf32> to vector<1x64xf32>
    %16 = vector.broadcast %15 : vector<1x64xf32> to vector<8x64xf32>
    %c0_12 = arith.constant 0 : index
    %c0_13 = arith.constant 0 : index
    %17 = vector.load %arg6[%c0_12, %c0_13] : memref<1x32xf32, #tpu.memory_space<vmem>>, vector<1x32xf32>
    %18 = vector.shape_cast %17 : vector<1x32xf32> to vector<1x32xf32>
    %19 = vector.broadcast %18 : vector<1x32xf32> to vector<8x32xf32>
    %c0_14 = arith.constant 0 : index
    %c0_15 = arith.constant 0 : index
    %20 = vector.load %arg7[%c0_14, %c0_15] : memref<1x32xf32, #tpu.memory_space<vmem>>, vector<1x32xf32>
    %21 = vector.shape_cast %20 : vector<1x32xf32> to vector<1x32xf32>
    %22 = vector.broadcast %21 : vector<1x32xf32> to vector<8x32xf32>
    %c0_16 = arith.constant 0 : index
    %c0_17 = arith.constant 0 : index
    %23 = vector.load %arg8[%c0_16, %c0_17] : memref<1x32xf32, #tpu.memory_space<vmem>>, vector<1x32xf32>
    %24 = vector.shape_cast %23 : vector<1x32xf32> to vector<1x32xf32>
    %25 = vector.broadcast %24 : vector<1x32xf32> to vector<8x32xf32>
    %26 = vector.extract_strided_slice %12 {offsets = [0, 0], sizes = [8, 96], strides = [1, 1]} : vector<64x96xf32> to vector<8x96xf32>
    %27 = vector.extract_strided_slice %26 {offsets = [0, 0], sizes = [8, 64], strides = [1, 1]} : vector<8x96xf32> to vector<8x64xf32>
    %28 = arith.negf %27 : vector<8x64xf32>
    %29 = math.exp %28 : vector<8x64xf32>
    %cst_18 = arith.constant 1.000000e+00 : f32
    %30 = vector.broadcast %cst_18 : f32 to vector<8x64xf32>
    %31 = arith.addf %30, %29 : vector<8x64xf32>
    %32 = arith.divf %30, %31 : vector<8x64xf32>
    %33 = vector.extract_strided_slice %26 {offsets = [0, 64], sizes = [8, 32], strides = [1, 1]} : vector<8x96xf32> to vector<8x32xf32>
    %34 = vector.extract_strided_slice %32 {offsets = [0, 0], sizes = [8, 32], strides = [1, 1]} : vector<8x64xf32> to vector<8x32xf32>
    %35 = arith.mulf %34, %25 : vector<8x32xf32>
    %36 = arith.addf %33, %35 : vector<8x32xf32>
    %37 = math.tanh %36 : vector<8x32xf32>
    %38 = vector.extract_strided_slice %32 {offsets = [0, 32], sizes = [8, 32], strides = [1, 1]} : vector<8x64xf32> to vector<8x32xf32>
    %cst_19 = arith.constant 1.000000e+00 : f32
    %39 = vector.broadcast %cst_19 : f32 to vector<8x32xf32>
    %40 = arith.subf %39, %38 : vector<8x32xf32>
    %41 = arith.mulf %40, %37 : vector<8x32xf32>
    %cst_20 = arith.constant 0.000000e+00 : f32
    %42 = vector.broadcast %cst_20 : f32 to vector<8x32xf32>
    %43 = tpu.concatenate %41, %42 in 1 : vector<8x32xf32>, vector<8x32xf32> -> vector<8x64xf32>
    %44 = arith.truncf %43 : vector<8x64xf32> to vector<8x64xbf16>
    %cst_21 = arith.constant dense<0.000000e+00> : vector<8x224xf32>
    %45 = tpu.matmul %44, %13, %cst_21 {dimension_numbers = #tpu.dot_dimension_numbers<[1], [0], [0], [1], [0, 0, 1, 1], [], []>} : vector<8x64xbf16>, vector<64x224xbf16>, vector<8x224xf32> -> vector<8x224xf32>
    %46 = vector.extract_strided_slice %45 {offsets = [0, 0], sizes = [8, 64], strides = [1, 1]} : vector<8x224xf32> to vector<8x64xf32>
    %47 = arith.addf %46, %16 : vector<8x64xf32>
    %48 = arith.negf %47 : vector<8x64xf32>
    %49 = math.exp %48 : vector<8x64xf32>
    %cst_22 = arith.constant 1.000000e+00 : f32
    %50 = vector.broadcast %cst_22 : f32 to vector<8x64xf32>
    %51 = arith.addf %50, %49 : vector<8x64xf32>
    %52 = arith.divf %50, %51 : vector<8x64xf32>
    %53 = vector.extract_strided_slice %45 {offsets = [0, 64], sizes = [8, 32], strides = [1, 1]} : vector<8x224xf32> to vector<8x32xf32>
    %54 = arith.addf %53, %19 : vector<8x32xf32>
    %55 = vector.extract_strided_slice %52 {offsets = [0, 0], sizes = [8, 32], strides = [1, 1]} : vector<8x64xf32> to vector<8x32xf32>
    %56 = vector.extract_strided_slice %45 {offsets = [0, 96], sizes = [8, 32], strides = [1, 1]} : vector<8x224xf32> to vector<8x32xf32>
    %57 = arith.addf %56, %22 : vector<8x32xf32>
    %58 = arith.mulf %55, %57 : vector<8x32xf32>
    %59 = arith.addf %54, %58 : vector<8x32xf32>
    %60 = math.tanh %59 : vector<8x32xf32>
    %61 = vector.extract_strided_slice %52 {offsets = [0, 32], sizes = [8, 32], strides = [1, 1]} : vector<8x64xf32> to vector<8x32xf32>
    %cst_23 = arith.constant 1.000000e+00 : f32
    %62 = vector.broadcast %cst_23 : f32 to vector<8x32xf32>
    %63 = arith.subf %62, %61 : vector<8x32xf32>
    %64 = arith.mulf %63, %60 : vector<8x32xf32>
    %65 = vector.extract_strided_slice %52 {offsets = [0, 32], sizes = [8, 32], strides = [1, 1]} : vector<8x64xf32> to vector<8x32xf32>
    %66 = arith.mulf %65, %42 : vector<8x32xf32>
    %67 = arith.addf %64, %66 : vector<8x32xf32>
    %68 = vector.extract_strided_slice %12 {offsets = [8, 0], sizes = [8, 96], strides = [1, 1]} : vector<64x96xf32> to vector<8x96xf32>
    %69 = vector.extract_strided_slice %68 {offsets = [0, 0], sizes = [8, 64], strides = [1, 1]} : vector<8x96xf32> to vector<8x64xf32>
    %70 = vector.extract_strided_slice %45 {offsets = [0, 128], sizes = [8, 64], strides = [1, 1]} : vector<8x224xf32> to vector<8x64xf32>
    %71 = arith.addf %69, %70 : vector<8x64xf32>
    %72 = arith.negf %71 : vector<8x64xf32>
    %73 = math.exp %72 : vector<8x64xf32>
    %cst_24 = arith.constant 1.000000e+00 : f32
    %74 = vector.broadcast %cst_24 : f32 to vector<8x64xf32>
    %75 = arith.addf %74, %73 : vector<8x64xf32>
    %76 = arith.divf %74, %75 : vector<8x64xf32>
    %77 = vector.extract_strided_slice %68 {offsets = [0, 64], sizes = [8, 32], strides = [1, 1]} : vector<8x96xf32> to vector<8x32xf32>
    %78 = vector.extract_strided_slice %76 {offsets = [0, 0], sizes = [8, 32], strides = [1, 1]} : vector<8x64xf32> to vector<8x32xf32>
    %79 = vector.extract_strided_slice %45 {offsets = [0, 192], sizes = [8, 32], strides = [1, 1]} : vector<8x224xf32> to vector<8x32xf32>
    %80 = arith.addf %79, %25 : vector<8x32xf32>
    %81 = arith.mulf %78, %80 : vector<8x32xf32>
    %82 = arith.addf %77, %81 : vector<8x32xf32>
    %83 = math.tanh %82 : vector<8x32xf32>
    %84 = vector.extract_strided_slice %76 {offsets = [0, 32], sizes = [8, 32], strides = [1, 1]} : vector<8x64xf32> to vector<8x32xf32>
    %cst_25 = arith.constant 1.000000e+00 : f32
    %85 = vector.broadcast %cst_25 : f32 to vector<8x32xf32>
    %86 = arith.subf %85, %84 : vector<8x32xf32>
    %87 = arith.mulf %86, %83 : vector<8x32xf32>
    %88 = vector.extract_strided_slice %76 {offsets = [0, 32], sizes = [8, 32], strides = [1, 1]} : vector<8x64xf32> to vector<8x32xf32>
    %89 = arith.mulf %88, %41 : vector<8x32xf32>
    %90 = arith.addf %87, %89 : vector<8x32xf32>
    %91 = tpu.concatenate %90, %67 in 1 : vector<8x32xf32>, vector<8x32xf32> -> vector<8x64xf32>
    %92 = arith.truncf %91 : vector<8x64xf32> to vector<8x64xbf16>
    %cst_26 = arith.constant dense<0.000000e+00> : vector<8x224xf32>
    %93 = tpu.matmul %92, %13, %cst_26 {dimension_numbers = #tpu.dot_dimension_numbers<[1], [0], [0], [1], [0, 0, 1, 1], [], []>} : vector<8x64xbf16>, vector<64x224xbf16>, vector<8x224xf32> -> vector<8x224xf32>
    %94 = vector.extract_strided_slice %93 {offsets = [0, 0], sizes = [8, 64], strides = [1, 1]} : vector<8x224xf32> to vector<8x64xf32>
    %95 = arith.addf %94, %16 : vector<8x64xf32>
    %96 = arith.negf %95 : vector<8x64xf32>
    %97 = math.exp %96 : vector<8x64xf32>
    %cst_27 = arith.constant 1.000000e+00 : f32
    %98 = vector.broadcast %cst_27 : f32 to vector<8x64xf32>
    %99 = arith.addf %98, %97 : vector<8x64xf32>
    %100 = arith.divf %98, %99 : vector<8x64xf32>
    %101 = vector.extract_strided_slice %93 {offsets = [0, 64], sizes = [8, 32], strides = [1, 1]} : vector<8x224xf32> to vector<8x32xf32>
    %102 = arith.addf %101, %19 : vector<8x32xf32>
    %103 = vector.extract_strided_slice %100 {offsets = [0, 0], sizes = [8, 32], strides = [1, 1]} : vector<8x64xf32> to vector<8x32xf32>
    %104 = vector.extract_strided_slice %93 {offsets = [0, 96], sizes = [8, 32], strides = [1, 1]} : vector<8x224xf32> to vector<8x32xf32>
    %105 = arith.addf %104, %22 : vector<8x32xf32>
    %106 = arith.mulf %103, %105 : vector<8x32xf32>
    %107 = arith.addf %102, %106 : vector<8x32xf32>
    %108 = math.tanh %107 : vector<8x32xf32>
    %109 = vector.extract_strided_slice %100 {offsets = [0, 32], sizes = [8, 32], strides = [1, 1]} : vector<8x64xf32> to vector<8x32xf32>
    %cst_28 = arith.constant 1.000000e+00 : f32
    %110 = vector.broadcast %cst_28 : f32 to vector<8x32xf32>
    %111 = arith.subf %110, %109 : vector<8x32xf32>
    %112 = arith.mulf %111, %108 : vector<8x32xf32>
    %113 = vector.extract_strided_slice %100 {offsets = [0, 32], sizes = [8, 32], strides = [1, 1]} : vector<8x64xf32> to vector<8x32xf32>
    %114 = arith.mulf %113, %67 : vector<8x32xf32>
    %115 = arith.addf %112, %114 : vector<8x32xf32>
    %116 = vector.extract_strided_slice %12 {offsets = [16, 0], sizes = [8, 96], strides = [1, 1]} : vector<64x96xf32> to vector<8x96xf32>
    %117 = vector.extract_strided_slice %116 {offsets = [0, 0], sizes = [8, 64], strides = [1, 1]} : vector<8x96xf32> to vector<8x64xf32>
    %118 = vector.extract_strided_slice %93 {offsets = [0, 128], sizes = [8, 64], strides = [1, 1]} : vector<8x224xf32> to vector<8x64xf32>
    %119 = arith.addf %117, %118 : vector<8x64xf32>
    %120 = arith.negf %119 : vector<8x64xf32>
    %121 = math.exp %120 : vector<8x64xf32>
    %cst_29 = arith.constant 1.000000e+00 : f32
    %122 = vector.broadcast %cst_29 : f32 to vector<8x64xf32>
    %123 = arith.addf %122, %121 : vector<8x64xf32>
    %124 = arith.divf %122, %123 : vector<8x64xf32>
    %125 = vector.extract_strided_slice %116 {offsets = [0, 64], sizes = [8, 32], strides = [1, 1]} : vector<8x96xf32> to vector<8x32xf32>
    %126 = vector.extract_strided_slice %124 {offsets = [0, 0], sizes = [8, 32], strides = [1, 1]} : vector<8x64xf32> to vector<8x32xf32>
    %127 = vector.extract_strided_slice %93 {offsets = [0, 192], sizes = [8, 32], strides = [1, 1]} : vector<8x224xf32> to vector<8x32xf32>
    %128 = arith.addf %127, %25 : vector<8x32xf32>
    %129 = arith.mulf %126, %128 : vector<8x32xf32>
    %130 = arith.addf %125, %129 : vector<8x32xf32>
    %131 = math.tanh %130 : vector<8x32xf32>
    %132 = vector.extract_strided_slice %124 {offsets = [0, 32], sizes = [8, 32], strides = [1, 1]} : vector<8x64xf32> to vector<8x32xf32>
    %cst_30 = arith.constant 1.000000e+00 : f32
    %133 = vector.broadcast %cst_30 : f32 to vector<8x32xf32>
    %134 = arith.subf %133, %132 : vector<8x32xf32>
    %135 = arith.mulf %134, %131 : vector<8x32xf32>
    %136 = vector.extract_strided_slice %124 {offsets = [0, 32], sizes = [8, 32], strides = [1, 1]} : vector<8x64xf32> to vector<8x32xf32>
    %137 = arith.mulf %136, %90 : vector<8x32xf32>
    %138 = arith.addf %135, %137 : vector<8x32xf32>
    %139 = tpu.concatenate %138, %115 in 1 : vector<8x32xf32>, vector<8x32xf32> -> vector<8x64xf32>
    %140 = arith.truncf %139 : vector<8x64xf32> to vector<8x64xbf16>
    %cst_31 = arith.constant dense<0.000000e+00> : vector<8x224xf32>
    %141 = tpu.matmul %140, %13, %cst_31 {dimension_numbers = #tpu.dot_dimension_numbers<[1], [0], [0], [1], [0, 0, 1, 1], [], []>} : vector<8x64xbf16>, vector<64x224xbf16>, vector<8x224xf32> -> vector<8x224xf32>
    %142 = vector.extract_strided_slice %141 {offsets = [0, 0], sizes = [8, 64], strides = [1, 1]} : vector<8x224xf32> to vector<8x64xf32>
    %143 = arith.addf %142, %16 : vector<8x64xf32>
    %144 = arith.negf %143 : vector<8x64xf32>
    %145 = math.exp %144 : vector<8x64xf32>
    %cst_32 = arith.constant 1.000000e+00 : f32
    %146 = vector.broadcast %cst_32 : f32 to vector<8x64xf32>
    %147 = arith.addf %146, %145 : vector<8x64xf32>
    %148 = arith.divf %146, %147 : vector<8x64xf32>
    %149 = vector.extract_strided_slice %141 {offsets = [0, 64], sizes = [8, 32], strides = [1, 1]} : vector<8x224xf32> to vector<8x32xf32>
    %150 = arith.addf %149, %19 : vector<8x32xf32>
    %151 = vector.extract_strided_slice %148 {offsets = [0, 0], sizes = [8, 32], strides = [1, 1]} : vector<8x64xf32> to vector<8x32xf32>
    %152 = vector.extract_strided_slice %141 {offsets = [0, 96], sizes = [8, 32], strides = [1, 1]} : vector<8x224xf32> to vector<8x32xf32>
    %153 = arith.addf %152, %22 : vector<8x32xf32>
    %154 = arith.mulf %151, %153 : vector<8x32xf32>
    %155 = arith.addf %150, %154 : vector<8x32xf32>
    %156 = math.tanh %155 : vector<8x32xf32>
    %157 = vector.extract_strided_slice %148 {offsets = [0, 32], sizes = [8, 32], strides = [1, 1]} : vector<8x64xf32> to vector<8x32xf32>
    %cst_33 = arith.constant 1.000000e+00 : f32
    %158 = vector.broadcast %cst_33 : f32 to vector<8x32xf32>
    %159 = arith.subf %158, %157 : vector<8x32xf32>
    %160 = arith.mulf %159, %156 : vector<8x32xf32>
    %161 = vector.extract_strided_slice %148 {offsets = [0, 32], sizes = [8, 32], strides = [1, 1]} : vector<8x64xf32> to vector<8x32xf32>
    %162 = arith.mulf %161, %115 : vector<8x32xf32>
    %163 = arith.addf %160, %162 : vector<8x32xf32>
    %164 = vector.extract_strided_slice %12 {offsets = [24, 0], sizes = [8, 96], strides = [1, 1]} : vector<64x96xf32> to vector<8x96xf32>
    %165 = vector.extract_strided_slice %164 {offsets = [0, 0], sizes = [8, 64], strides = [1, 1]} : vector<8x96xf32> to vector<8x64xf32>
    %166 = vector.extract_strided_slice %141 {offsets = [0, 128], sizes = [8, 64], strides = [1, 1]} : vector<8x224xf32> to vector<8x64xf32>
    %167 = arith.addf %165, %166 : vector<8x64xf32>
    %168 = arith.negf %167 : vector<8x64xf32>
    %169 = math.exp %168 : vector<8x64xf32>
    %cst_34 = arith.constant 1.000000e+00 : f32
    %170 = vector.broadcast %cst_34 : f32 to vector<8x64xf32>
    %171 = arith.addf %170, %169 : vector<8x64xf32>
    %172 = arith.divf %170, %171 : vector<8x64xf32>
    %173 = vector.extract_strided_slice %164 {offsets = [0, 64], sizes = [8, 32], strides = [1, 1]} : vector<8x96xf32> to vector<8x32xf32>
    %174 = vector.extract_strided_slice %172 {offsets = [0, 0], sizes = [8, 32], strides = [1, 1]} : vector<8x64xf32> to vector<8x32xf32>
    %175 = vector.extract_strided_slice %141 {offsets = [0, 192], sizes = [8, 32], strides = [1, 1]} : vector<8x224xf32> to vector<8x32xf32>
    %176 = arith.addf %175, %25 : vector<8x32xf32>
    %177 = arith.mulf %174, %176 : vector<8x32xf32>
    %178 = arith.addf %173, %177 : vector<8x32xf32>
    %179 = math.tanh %178 : vector<8x32xf32>
    %180 = vector.extract_strided_slice %172 {offsets = [0, 32], sizes = [8, 32], strides = [1, 1]} : vector<8x64xf32> to vector<8x32xf32>
    %cst_35 = arith.constant 1.000000e+00 : f32
    %181 = vector.broadcast %cst_35 : f32 to vector<8x32xf32>
    %182 = arith.subf %181, %180 : vector<8x32xf32>
    %183 = arith.mulf %182, %179 : vector<8x32xf32>
    %184 = vector.extract_strided_slice %172 {offsets = [0, 32], sizes = [8, 32], strides = [1, 1]} : vector<8x64xf32> to vector<8x32xf32>
    %185 = arith.mulf %184, %138 : vector<8x32xf32>
    %186 = arith.addf %183, %185 : vector<8x32xf32>
    %187 = tpu.concatenate %186, %163 in 1 : vector<8x32xf32>, vector<8x32xf32> -> vector<8x64xf32>
    %188 = arith.truncf %187 : vector<8x64xf32> to vector<8x64xbf16>
    %cst_36 = arith.constant dense<0.000000e+00> : vector<8x224xf32>
    %189 = tpu.matmul %188, %13, %cst_36 {dimension_numbers = #tpu.dot_dimension_numbers<[1], [0], [0], [1], [0, 0, 1, 1], [], []>} : vector<8x64xbf16>, vector<64x224xbf16>, vector<8x224xf32> -> vector<8x224xf32>
    %190 = vector.extract_strided_slice %189 {offsets = [0, 0], sizes = [8, 64], strides = [1, 1]} : vector<8x224xf32> to vector<8x64xf32>
    %191 = arith.addf %190, %16 : vector<8x64xf32>
    %192 = arith.negf %191 : vector<8x64xf32>
    %193 = math.exp %192 : vector<8x64xf32>
    %cst_37 = arith.constant 1.000000e+00 : f32
    %194 = vector.broadcast %cst_37 : f32 to vector<8x64xf32>
    %195 = arith.addf %194, %193 : vector<8x64xf32>
    %196 = arith.divf %194, %195 : vector<8x64xf32>
    %197 = vector.extract_strided_slice %189 {offsets = [0, 64], sizes = [8, 32], strides = [1, 1]} : vector<8x224xf32> to vector<8x32xf32>
    %198 = arith.addf %197, %19 : vector<8x32xf32>
    %199 = vector.extract_strided_slice %196 {offsets = [0, 0], sizes = [8, 32], strides = [1, 1]} : vector<8x64xf32> to vector<8x32xf32>
    %200 = vector.extract_strided_slice %189 {offsets = [0, 96], sizes = [8, 32], strides = [1, 1]} : vector<8x224xf32> to vector<8x32xf32>
    %201 = arith.addf %200, %22 : vector<8x32xf32>
    %202 = arith.mulf %199, %201 : vector<8x32xf32>
    %203 = arith.addf %198, %202 : vector<8x32xf32>
    %204 = math.tanh %203 : vector<8x32xf32>
    %205 = vector.extract_strided_slice %196 {offsets = [0, 32], sizes = [8, 32], strides = [1, 1]} : vector<8x64xf32> to vector<8x32xf32>
    %cst_38 = arith.constant 1.000000e+00 : f32
    %206 = vector.broadcast %cst_38 : f32 to vector<8x32xf32>
    %207 = arith.subf %206, %205 : vector<8x32xf32>
    %208 = arith.mulf %207, %204 : vector<8x32xf32>
    %209 = vector.extract_strided_slice %196 {offsets = [0, 32], sizes = [8, 32], strides = [1, 1]} : vector<8x64xf32> to vector<8x32xf32>
    %210 = arith.mulf %209, %163 : vector<8x32xf32>
    %211 = arith.addf %208, %210 : vector<8x32xf32>
    %212 = vector.extract_strided_slice %12 {offsets = [32, 0], sizes = [8, 96], strides = [1, 1]} : vector<64x96xf32> to vector<8x96xf32>
    %213 = vector.extract_strided_slice %212 {offsets = [0, 0], sizes = [8, 64], strides = [1, 1]} : vector<8x96xf32> to vector<8x64xf32>
    %214 = vector.extract_strided_slice %189 {offsets = [0, 128], sizes = [8, 64], strides = [1, 1]} : vector<8x224xf32> to vector<8x64xf32>
    %215 = arith.addf %213, %214 : vector<8x64xf32>
    %216 = arith.negf %215 : vector<8x64xf32>
    %217 = math.exp %216 : vector<8x64xf32>
    %cst_39 = arith.constant 1.000000e+00 : f32
    %218 = vector.broadcast %cst_39 : f32 to vector<8x64xf32>
    %219 = arith.addf %218, %217 : vector<8x64xf32>
    %220 = arith.divf %218, %219 : vector<8x64xf32>
    %221 = vector.extract_strided_slice %212 {offsets = [0, 64], sizes = [8, 32], strides = [1, 1]} : vector<8x96xf32> to vector<8x32xf32>
    %222 = vector.extract_strided_slice %220 {offsets = [0, 0], sizes = [8, 32], strides = [1, 1]} : vector<8x64xf32> to vector<8x32xf32>
    %223 = vector.extract_strided_slice %189 {offsets = [0, 192], sizes = [8, 32], strides = [1, 1]} : vector<8x224xf32> to vector<8x32xf32>
    %224 = arith.addf %223, %25 : vector<8x32xf32>
    %225 = arith.mulf %222, %224 : vector<8x32xf32>
    %226 = arith.addf %221, %225 : vector<8x32xf32>
    %227 = math.tanh %226 : vector<8x32xf32>
    %228 = vector.extract_strided_slice %220 {offsets = [0, 32], sizes = [8, 32], strides = [1, 1]} : vector<8x64xf32> to vector<8x32xf32>
    %cst_40 = arith.constant 1.000000e+00 : f32
    %229 = vector.broadcast %cst_40 : f32 to vector<8x32xf32>
    %230 = arith.subf %229, %228 : vector<8x32xf32>
    %231 = arith.mulf %230, %227 : vector<8x32xf32>
    %232 = vector.extract_strided_slice %220 {offsets = [0, 32], sizes = [8, 32], strides = [1, 1]} : vector<8x64xf32> to vector<8x32xf32>
    %233 = arith.mulf %232, %186 : vector<8x32xf32>
    %234 = arith.addf %231, %233 : vector<8x32xf32>
    %235 = tpu.concatenate %234, %211 in 1 : vector<8x32xf32>, vector<8x32xf32> -> vector<8x64xf32>
    %236 = arith.truncf %235 : vector<8x64xf32> to vector<8x64xbf16>
    %cst_41 = arith.constant dense<0.000000e+00> : vector<8x224xf32>
    %237 = tpu.matmul %236, %13, %cst_41 {dimension_numbers = #tpu.dot_dimension_numbers<[1], [0], [0], [1], [0, 0, 1, 1], [], []>} : vector<8x64xbf16>, vector<64x224xbf16>, vector<8x224xf32> -> vector<8x224xf32>
    %238 = vector.extract_strided_slice %237 {offsets = [0, 0], sizes = [8, 64], strides = [1, 1]} : vector<8x224xf32> to vector<8x64xf32>
    %239 = arith.addf %238, %16 : vector<8x64xf32>
    %240 = arith.negf %239 : vector<8x64xf32>
    %241 = math.exp %240 : vector<8x64xf32>
    %cst_42 = arith.constant 1.000000e+00 : f32
    %242 = vector.broadcast %cst_42 : f32 to vector<8x64xf32>
    %243 = arith.addf %242, %241 : vector<8x64xf32>
    %244 = arith.divf %242, %243 : vector<8x64xf32>
    %245 = vector.extract_strided_slice %237 {offsets = [0, 64], sizes = [8, 32], strides = [1, 1]} : vector<8x224xf32> to vector<8x32xf32>
    %246 = arith.addf %245, %19 : vector<8x32xf32>
    %247 = vector.extract_strided_slice %244 {offsets = [0, 0], sizes = [8, 32], strides = [1, 1]} : vector<8x64xf32> to vector<8x32xf32>
    %248 = vector.extract_strided_slice %237 {offsets = [0, 96], sizes = [8, 32], strides = [1, 1]} : vector<8x224xf32> to vector<8x32xf32>
    %249 = arith.addf %248, %22 : vector<8x32xf32>
    %250 = arith.mulf %247, %249 : vector<8x32xf32>
    %251 = arith.addf %246, %250 : vector<8x32xf32>
    %252 = math.tanh %251 : vector<8x32xf32>
    %253 = vector.extract_strided_slice %244 {offsets = [0, 32], sizes = [8, 32], strides = [1, 1]} : vector<8x64xf32> to vector<8x32xf32>
    %cst_43 = arith.constant 1.000000e+00 : f32
    %254 = vector.broadcast %cst_43 : f32 to vector<8x32xf32>
    %255 = arith.subf %254, %253 : vector<8x32xf32>
    %256 = arith.mulf %255, %252 : vector<8x32xf32>
    %257 = vector.extract_strided_slice %244 {offsets = [0, 32], sizes = [8, 32], strides = [1, 1]} : vector<8x64xf32> to vector<8x32xf32>
    %258 = arith.mulf %257, %211 : vector<8x32xf32>
    %259 = arith.addf %256, %258 : vector<8x32xf32>
    %260 = vector.extract_strided_slice %12 {offsets = [40, 0], sizes = [8, 96], strides = [1, 1]} : vector<64x96xf32> to vector<8x96xf32>
    %261 = vector.extract_strided_slice %260 {offsets = [0, 0], sizes = [8, 64], strides = [1, 1]} : vector<8x96xf32> to vector<8x64xf32>
    %262 = vector.extract_strided_slice %237 {offsets = [0, 128], sizes = [8, 64], strides = [1, 1]} : vector<8x224xf32> to vector<8x64xf32>
    %263 = arith.addf %261, %262 : vector<8x64xf32>
    %264 = arith.negf %263 : vector<8x64xf32>
    %265 = math.exp %264 : vector<8x64xf32>
    %cst_44 = arith.constant 1.000000e+00 : f32
    %266 = vector.broadcast %cst_44 : f32 to vector<8x64xf32>
    %267 = arith.addf %266, %265 : vector<8x64xf32>
    %268 = arith.divf %266, %267 : vector<8x64xf32>
    %269 = vector.extract_strided_slice %260 {offsets = [0, 64], sizes = [8, 32], strides = [1, 1]} : vector<8x96xf32> to vector<8x32xf32>
    %270 = vector.extract_strided_slice %268 {offsets = [0, 0], sizes = [8, 32], strides = [1, 1]} : vector<8x64xf32> to vector<8x32xf32>
    %271 = vector.extract_strided_slice %237 {offsets = [0, 192], sizes = [8, 32], strides = [1, 1]} : vector<8x224xf32> to vector<8x32xf32>
    %272 = arith.addf %271, %25 : vector<8x32xf32>
    %273 = arith.mulf %270, %272 : vector<8x32xf32>
    %274 = arith.addf %269, %273 : vector<8x32xf32>
    %275 = math.tanh %274 : vector<8x32xf32>
    %276 = vector.extract_strided_slice %268 {offsets = [0, 32], sizes = [8, 32], strides = [1, 1]} : vector<8x64xf32> to vector<8x32xf32>
    %cst_45 = arith.constant 1.000000e+00 : f32
    %277 = vector.broadcast %cst_45 : f32 to vector<8x32xf32>
    %278 = arith.subf %277, %276 : vector<8x32xf32>
    %279 = arith.mulf %278, %275 : vector<8x32xf32>
    %280 = vector.extract_strided_slice %268 {offsets = [0, 32], sizes = [8, 32], strides = [1, 1]} : vector<8x64xf32> to vector<8x32xf32>
    %281 = arith.mulf %280, %234 : vector<8x32xf32>
    %282 = arith.addf %279, %281 : vector<8x32xf32>
    %283 = tpu.concatenate %282, %259 in 1 : vector<8x32xf32>, vector<8x32xf32> -> vector<8x64xf32>
    %284 = arith.truncf %283 : vector<8x64xf32> to vector<8x64xbf16>
    %cst_46 = arith.constant dense<0.000000e+00> : vector<8x224xf32>
    %285 = tpu.matmul %284, %13, %cst_46 {dimension_numbers = #tpu.dot_dimension_numbers<[1], [0], [0], [1], [0, 0, 1, 1], [], []>} : vector<8x64xbf16>, vector<64x224xbf16>, vector<8x224xf32> -> vector<8x224xf32>
    %286 = vector.extract_strided_slice %285 {offsets = [0, 0], sizes = [8, 64], strides = [1, 1]} : vector<8x224xf32> to vector<8x64xf32>
    %287 = arith.addf %286, %16 : vector<8x64xf32>
    %288 = arith.negf %287 : vector<8x64xf32>
    %289 = math.exp %288 : vector<8x64xf32>
    %cst_47 = arith.constant 1.000000e+00 : f32
    %290 = vector.broadcast %cst_47 : f32 to vector<8x64xf32>
    %291 = arith.addf %290, %289 : vector<8x64xf32>
    %292 = arith.divf %290, %291 : vector<8x64xf32>
    %293 = vector.extract_strided_slice %285 {offsets = [0, 64], sizes = [8, 32], strides = [1, 1]} : vector<8x224xf32> to vector<8x32xf32>
    %294 = arith.addf %293, %19 : vector<8x32xf32>
    %295 = vector.extract_strided_slice %292 {offsets = [0, 0], sizes = [8, 32], strides = [1, 1]} : vector<8x64xf32> to vector<8x32xf32>
    %296 = vector.extract_strided_slice %285 {offsets = [0, 96], sizes = [8, 32], strides = [1, 1]} : vector<8x224xf32> to vector<8x32xf32>
    %297 = arith.addf %296, %22 : vector<8x32xf32>
    %298 = arith.mulf %295, %297 : vector<8x32xf32>
    %299 = arith.addf %294, %298 : vector<8x32xf32>
    %300 = math.tanh %299 : vector<8x32xf32>
    %301 = vector.extract_strided_slice %292 {offsets = [0, 32], sizes = [8, 32], strides = [1, 1]} : vector<8x64xf32> to vector<8x32xf32>
    %cst_48 = arith.constant 1.000000e+00 : f32
    %302 = vector.broadcast %cst_48 : f32 to vector<8x32xf32>
    %303 = arith.subf %302, %301 : vector<8x32xf32>
    %304 = arith.mulf %303, %300 : vector<8x32xf32>
    %305 = vector.extract_strided_slice %292 {offsets = [0, 32], sizes = [8, 32], strides = [1, 1]} : vector<8x64xf32> to vector<8x32xf32>
    %306 = arith.mulf %305, %259 : vector<8x32xf32>
    %307 = arith.addf %304, %306 : vector<8x32xf32>
    %308 = vector.extract_strided_slice %12 {offsets = [48, 0], sizes = [8, 96], strides = [1, 1]} : vector<64x96xf32> to vector<8x96xf32>
    %309 = vector.extract_strided_slice %308 {offsets = [0, 0], sizes = [8, 64], strides = [1, 1]} : vector<8x96xf32> to vector<8x64xf32>
    %310 = vector.extract_strided_slice %285 {offsets = [0, 128], sizes = [8, 64], strides = [1, 1]} : vector<8x224xf32> to vector<8x64xf32>
    %311 = arith.addf %309, %310 : vector<8x64xf32>
    %312 = arith.negf %311 : vector<8x64xf32>
    %313 = math.exp %312 : vector<8x64xf32>
    %cst_49 = arith.constant 1.000000e+00 : f32
    %314 = vector.broadcast %cst_49 : f32 to vector<8x64xf32>
    %315 = arith.addf %314, %313 : vector<8x64xf32>
    %316 = arith.divf %314, %315 : vector<8x64xf32>
    %317 = vector.extract_strided_slice %308 {offsets = [0, 64], sizes = [8, 32], strides = [1, 1]} : vector<8x96xf32> to vector<8x32xf32>
    %318 = vector.extract_strided_slice %316 {offsets = [0, 0], sizes = [8, 32], strides = [1, 1]} : vector<8x64xf32> to vector<8x32xf32>
    %319 = vector.extract_strided_slice %285 {offsets = [0, 192], sizes = [8, 32], strides = [1, 1]} : vector<8x224xf32> to vector<8x32xf32>
    %320 = arith.addf %319, %25 : vector<8x32xf32>
    %321 = arith.mulf %318, %320 : vector<8x32xf32>
    %322 = arith.addf %317, %321 : vector<8x32xf32>
    %323 = math.tanh %322 : vector<8x32xf32>
    %324 = vector.extract_strided_slice %316 {offsets = [0, 32], sizes = [8, 32], strides = [1, 1]} : vector<8x64xf32> to vector<8x32xf32>
    %cst_50 = arith.constant 1.000000e+00 : f32
    %325 = vector.broadcast %cst_50 : f32 to vector<8x32xf32>
    %326 = arith.subf %325, %324 : vector<8x32xf32>
    %327 = arith.mulf %326, %323 : vector<8x32xf32>
    %328 = vector.extract_strided_slice %316 {offsets = [0, 32], sizes = [8, 32], strides = [1, 1]} : vector<8x64xf32> to vector<8x32xf32>
    %329 = arith.mulf %328, %282 : vector<8x32xf32>
    %330 = arith.addf %327, %329 : vector<8x32xf32>
    %331 = tpu.concatenate %330, %307 in 1 : vector<8x32xf32>, vector<8x32xf32> -> vector<8x64xf32>
    %332 = arith.truncf %331 : vector<8x64xf32> to vector<8x64xbf16>
    %cst_51 = arith.constant dense<0.000000e+00> : vector<8x224xf32>
    %333 = tpu.matmul %332, %13, %cst_51 {dimension_numbers = #tpu.dot_dimension_numbers<[1], [0], [0], [1], [0, 0, 1, 1], [], []>} : vector<8x64xbf16>, vector<64x224xbf16>, vector<8x224xf32> -> vector<8x224xf32>
    %334 = vector.extract_strided_slice %333 {offsets = [0, 0], sizes = [8, 64], strides = [1, 1]} : vector<8x224xf32> to vector<8x64xf32>
    %335 = arith.addf %334, %16 : vector<8x64xf32>
    %336 = arith.negf %335 : vector<8x64xf32>
    %337 = math.exp %336 : vector<8x64xf32>
    %cst_52 = arith.constant 1.000000e+00 : f32
    %338 = vector.broadcast %cst_52 : f32 to vector<8x64xf32>
    %339 = arith.addf %338, %337 : vector<8x64xf32>
    %340 = arith.divf %338, %339 : vector<8x64xf32>
    %341 = vector.extract_strided_slice %333 {offsets = [0, 64], sizes = [8, 32], strides = [1, 1]} : vector<8x224xf32> to vector<8x32xf32>
    %342 = arith.addf %341, %19 : vector<8x32xf32>
    %343 = vector.extract_strided_slice %340 {offsets = [0, 0], sizes = [8, 32], strides = [1, 1]} : vector<8x64xf32> to vector<8x32xf32>
    %344 = vector.extract_strided_slice %333 {offsets = [0, 96], sizes = [8, 32], strides = [1, 1]} : vector<8x224xf32> to vector<8x32xf32>
    %345 = arith.addf %344, %22 : vector<8x32xf32>
    %346 = arith.mulf %343, %345 : vector<8x32xf32>
    %347 = arith.addf %342, %346 : vector<8x32xf32>
    %348 = math.tanh %347 : vector<8x32xf32>
    %349 = vector.extract_strided_slice %340 {offsets = [0, 32], sizes = [8, 32], strides = [1, 1]} : vector<8x64xf32> to vector<8x32xf32>
    %cst_53 = arith.constant 1.000000e+00 : f32
    %350 = vector.broadcast %cst_53 : f32 to vector<8x32xf32>
    %351 = arith.subf %350, %349 : vector<8x32xf32>
    %352 = arith.mulf %351, %348 : vector<8x32xf32>
    %353 = vector.extract_strided_slice %340 {offsets = [0, 32], sizes = [8, 32], strides = [1, 1]} : vector<8x64xf32> to vector<8x32xf32>
    %354 = arith.mulf %353, %307 : vector<8x32xf32>
    %355 = arith.addf %352, %354 : vector<8x32xf32>
    %356 = vector.extract_strided_slice %12 {offsets = [56, 0], sizes = [8, 96], strides = [1, 1]} : vector<64x96xf32> to vector<8x96xf32>
    %357 = vector.extract_strided_slice %356 {offsets = [0, 0], sizes = [8, 64], strides = [1, 1]} : vector<8x96xf32> to vector<8x64xf32>
    %358 = vector.extract_strided_slice %333 {offsets = [0, 128], sizes = [8, 64], strides = [1, 1]} : vector<8x224xf32> to vector<8x64xf32>
    %359 = arith.addf %357, %358 : vector<8x64xf32>
    %360 = arith.negf %359 : vector<8x64xf32>
    %361 = math.exp %360 : vector<8x64xf32>
    %cst_54 = arith.constant 1.000000e+00 : f32
    %362 = vector.broadcast %cst_54 : f32 to vector<8x64xf32>
    %363 = arith.addf %362, %361 : vector<8x64xf32>
    %364 = arith.divf %362, %363 : vector<8x64xf32>
    %365 = vector.extract_strided_slice %356 {offsets = [0, 64], sizes = [8, 32], strides = [1, 1]} : vector<8x96xf32> to vector<8x32xf32>
    %366 = vector.extract_strided_slice %364 {offsets = [0, 0], sizes = [8, 32], strides = [1, 1]} : vector<8x64xf32> to vector<8x32xf32>
    %367 = vector.extract_strided_slice %333 {offsets = [0, 192], sizes = [8, 32], strides = [1, 1]} : vector<8x224xf32> to vector<8x32xf32>
    %368 = arith.addf %367, %25 : vector<8x32xf32>
    %369 = arith.mulf %366, %368 : vector<8x32xf32>
    %370 = arith.addf %365, %369 : vector<8x32xf32>
    %371 = math.tanh %370 : vector<8x32xf32>
    %372 = vector.extract_strided_slice %364 {offsets = [0, 32], sizes = [8, 32], strides = [1, 1]} : vector<8x64xf32> to vector<8x32xf32>
    %cst_55 = arith.constant 1.000000e+00 : f32
    %373 = vector.broadcast %cst_55 : f32 to vector<8x32xf32>
    %374 = arith.subf %373, %372 : vector<8x32xf32>
    %375 = arith.mulf %374, %371 : vector<8x32xf32>
    %376 = vector.extract_strided_slice %364 {offsets = [0, 32], sizes = [8, 32], strides = [1, 1]} : vector<8x64xf32> to vector<8x32xf32>
    %377 = arith.mulf %376, %330 : vector<8x32xf32>
    %378 = arith.addf %375, %377 : vector<8x32xf32>
    %379 = tpu.concatenate %378, %355 in 1 : vector<8x32xf32>, vector<8x32xf32> -> vector<8x64xf32>
    %380 = arith.truncf %379 : vector<8x64xf32> to vector<8x64xbf16>
    %cst_56 = arith.constant dense<0.000000e+00> : vector<8x224xf32>
    %381 = tpu.matmul %380, %13, %cst_56 {dimension_numbers = #tpu.dot_dimension_numbers<[1], [0], [0], [1], [0, 0, 1, 1], [], []>} : vector<8x64xbf16>, vector<64x224xbf16>, vector<8x224xf32> -> vector<8x224xf32>
    %382 = vector.extract_strided_slice %381 {offsets = [0, 0], sizes = [8, 64], strides = [1, 1]} : vector<8x224xf32> to vector<8x64xf32>
    %383 = arith.addf %382, %16 : vector<8x64xf32>
    %384 = arith.negf %383 : vector<8x64xf32>
    %385 = math.exp %384 : vector<8x64xf32>
    %cst_57 = arith.constant 1.000000e+00 : f32
    %386 = vector.broadcast %cst_57 : f32 to vector<8x64xf32>
    %387 = arith.addf %386, %385 : vector<8x64xf32>
    %388 = arith.divf %386, %387 : vector<8x64xf32>
    %389 = vector.extract_strided_slice %381 {offsets = [0, 64], sizes = [8, 32], strides = [1, 1]} : vector<8x224xf32> to vector<8x32xf32>
    %390 = arith.addf %389, %19 : vector<8x32xf32>
    %391 = vector.extract_strided_slice %388 {offsets = [0, 0], sizes = [8, 32], strides = [1, 1]} : vector<8x64xf32> to vector<8x32xf32>
    %392 = vector.extract_strided_slice %381 {offsets = [0, 96], sizes = [8, 32], strides = [1, 1]} : vector<8x224xf32> to vector<8x32xf32>
    %393 = arith.addf %392, %22 : vector<8x32xf32>
    %394 = arith.mulf %391, %393 : vector<8x32xf32>
    %395 = arith.addf %390, %394 : vector<8x32xf32>
    %396 = math.tanh %395 : vector<8x32xf32>
    %397 = vector.extract_strided_slice %388 {offsets = [0, 32], sizes = [8, 32], strides = [1, 1]} : vector<8x64xf32> to vector<8x32xf32>
    %cst_58 = arith.constant 1.000000e+00 : f32
    %398 = vector.broadcast %cst_58 : f32 to vector<8x32xf32>
    %399 = arith.subf %398, %397 : vector<8x32xf32>
    %400 = arith.mulf %399, %396 : vector<8x32xf32>
    %401 = vector.extract_strided_slice %388 {offsets = [0, 32], sizes = [8, 32], strides = [1, 1]} : vector<8x64xf32> to vector<8x32xf32>
    %402 = arith.mulf %401, %355 : vector<8x32xf32>
    %403 = arith.addf %400, %402 : vector<8x32xf32>
    %c0_59 = arith.constant 0 : index
    %c0_60 = arith.constant 0 : index
    %404 = vector.load %arg9[%c0_59, %c0_60] : memref<1x32xf32, #tpu.memory_space<vmem>>, vector<1x32xf32>
    %405 = vector.shape_cast %404 : vector<1x32xf32> to vector<1x32xf32>
    %406 = vector.broadcast %405 : vector<1x32xf32> to vector<8x32xf32>
    %407 = arith.mulf %403, %406 : vector<8x32xf32>
    %cst_61 = arith.constant dense<0.000000e+00> : vector<8xf32>
    %408 = vector.multi_reduction <add>, %407, %cst_61 [1] : vector<8x32xf32> to vector<8xf32>
    %409 = vector.shape_cast %408 : vector<8xf32> to vector<8x1xf32>
    %c0_62 = arith.constant 0 : index
    %c0_63 = arith.constant 0 : index
    %410 = vector.load %arg10[%c0_62, %c0_63] : memref<1x1xf32, #tpu.memory_space<vmem>>, vector<1x1xf32>
    %411 = vector.broadcast %410 : vector<1x1xf32> to vector<8x1xf32>
    %412 = arith.addf %409, %411 : vector<8x1xf32>
    %cst_64 = arith.constant 0.000000e+00 : f32
    %413 = vector.broadcast %cst_64 : f32 to vector<8x1xf32>
    %414 = arith.maximumf %412, %413 : vector<8x1xf32>
    %cst_65 = arith.constant 0.899999976 : f32
    %415 = vector.broadcast %cst_65 : f32 to vector<8x1xf32>
    %416 = arith.mulf %412, %415 : vector<8x1xf32>
    %417 = arith.subf %414, %416 : vector<8x1xf32>
    %418 = math.absf %412 : vector<8x1xf32>
    %cst_66 = arith.constant 0.000000e+00 : f32
    %419 = vector.broadcast %cst_66 : f32 to vector<8x1xf32>
    %420 = arith.subf %419, %418 : vector<8x1xf32>
    %421 = math.exp %420 : vector<8x1xf32>
    %cst_67 = arith.constant 1.000000e+00 : f32
    %422 = vector.broadcast %cst_67 : f32 to vector<8x1xf32>
    %423 = arith.addf %422, %421 : vector<8x1xf32>
    %424 = math.log %423 : vector<8x1xf32>
    %425 = arith.addf %417, %424 : vector<8x1xf32>
    %426 = vector.shape_cast %425 : vector<8x1xf32> to vector<1x8x1xf32>
    %cst_68 = arith.constant dense<0.000000e+00> : vector<1xf32>
    %427 = vector.multi_reduction <add>, %426, %cst_68 [1, 2] : vector<1x8x1xf32> to vector<1xf32>
    %428 = vector.shape_cast %427 : vector<1xf32> to vector<1x1x1xf32>
    %429 = vector.extract %428[0, 0, 0] : f32 from vector<1x1x1xf32>
    %430 = vector.broadcast %429 : f32 to vector<1x1xf32>
    %cst_69 = arith.constant 8.000000e+00 : f32
    %431 = vector.broadcast %cst_69 : f32 to vector<1x1xf32>
    %432 = arith.divf %430, %431 : vector<1x1xf32>
    %c0_70 = arith.constant 0 : index
    %c0_71 = arith.constant 0 : index
    %433 = vector.load %arg11[%c0_70, %c0_71] : memref<1x1xf32, #tpu.memory_space<vmem>>, vector<1x1xf32>
    tpu.vector_store %arg11[%c0_70, %c0_71], %432 {strides = array<i32>} : memref<1x1xf32, #tpu.memory_space<vmem>>, vector<1x1xf32>,
    %434 = arith.negf %412 : vector<8x1xf32>
    %435 = math.exp %434 : vector<8x1xf32>
    %cst_72 = arith.constant 1.000000e+00 : f32
    %436 = vector.broadcast %cst_72 : f32 to vector<8x1xf32>
    %437 = arith.addf %436, %435 : vector<8x1xf32>
    %438 = arith.divf %436, %437 : vector<8x1xf32>
    %c0_73 = arith.constant 0 : index
    %c0_74 = arith.constant 0 : index
    %439 = vector.load %arg12[%c0_73, %c0_74] : memref<8x1xf32, #tpu.memory_space<vmem>>, vector<8x1xf32>
    tpu.vector_store %arg12[%c0_73, %c0_74], %438 {strides = array<i32>} : memref<8x1xf32, #tpu.memory_space<vmem>>, vector<8x1xf32>,
    return
  }
}

</mosaic_0001>

<llo_original>
// kernel: discriminator_forward.1
$region0: #{discriminator_forward.1}
  #allocation0 [shape = 'u32[]', space=smem, size = 0x4, offset = 0x4, fixed_abs, tag = 'smem constant byte address 0x4 - core index']
  #allocation1 [shape = 'u32[72,128]{1,0:T(1,128)}', space=vmem, size = 0x9000, scoped, tag = 'internal scratch']
  #allocation2 [shape = 'f32[1,1]{1,0:T(1,128)S(1)}', space=vmem, size = 0x200, scoped, tag = 'scoped memory for discriminator_forward.1']
  %s0 = inlined_call_operand.vmem [shape: s32[64,1], index: 0, kind: input, shape index: {}]
  %s1 = inlined_call_operand.vmem [shape: f32[32,32], index: 1, kind: input, shape index: {}]
  %s2 = inlined_call_operand.vmem [shape: f32[32,96], index: 2, kind: input, shape index: {}]
  %s3 = inlined_call_operand.vmem [shape: f32[1,96], index: 3, kind: input, shape index: {}]
  %s4 = inlined_call_operand.vmem [shape: bf16[64,224], index: 4, kind: input, shape index: {}]
  %s5 = inlined_call_operand.vmem [shape: f32[1,64], index: 5, kind: input, shape index: {}]
  %s6 = inlined_call_operand.vmem [shape: f32[1,32], index: 6, kind: input, shape index: {}]
  %s7 = inlined_call_operand.vmem [shape: f32[1,32], index: 7, kind: input, shape index: {}]
  %s8 = inlined_call_operand.vmem [shape: f32[1,32], index: 8, kind: input, shape index: {}]
  %s9 = inlined_call_operand.vmem [shape: f32[1,32], index: 9, kind: input, shape index: {}]
  %s10 = inlined_call_operand.<no memory space> [shape: f32[1,1], index: 10, kind: input, shape index: {}]
  %s11 = inlined_call_operand.hbm [shape: f32[1,1], index: 11, kind: output, shape index: {0}]
  %s12 = inlined_call_operand.vmem [shape: f32[8,1], index: 12, kind: output, shape index: {1}]
  %13 = xla_tuple %s11, %s12
  %s14 = sld [smem:[#allocation0]]
  $region62: #{discriminator_forward.1} parent=0
    _
  %s16 = ssub.s32 1, %s14
  %s17 = scalar_select 0, %s16, %s14
  %v18 = vstv %s10
  %19 = vst [vmem:[#allocation2] sm:$0x1] %v18
  $region1: #{discriminator_forward.1} parent=0
    #allocation3 [shape = 'u8[512]{0}', space=vmem, size = 0x400, scoped, tag = 'output window, operand 0, single buffered']
    #allocation4 [shape = 's32[1]{0}', space=sflag, size = 0x4, scoped, tag = 'scoped memory for discriminator_forward.1']
    %20 = vsyncpa [#allocation4], 0
    // Predicated region
    $region2: #{discriminator_forward.1} parent=1 // pred_check
      _
    $region3: #{discriminator_forward.1} parent=1 // pred_check_branch
      %22 = sbr.rel (0) target = $region5
    $region4: #{discriminator_forward.1} parent=1 // pred_region
      _
    $region5: #{discriminator_forward.1} parent=1 // pred_fallthru
      _
    // Predicated region
    $region6: #{discriminator_forward.1} parent=1 // pred_check
      _
    $region7: #{discriminator_forward.1} parent=1 // pred_check_branch
      %24 = sbr.rel (0) target = $region9
    $region8: #{discriminator_forward.1} parent=1 // pred_region
      _
    $region9: #{discriminator_forward.1} parent=1 // pred_fallthru
      _
    // Predicated region
    $region10: #{discriminator_forward.1} parent=1 // pred_check
      _
    $region11: #{discriminator_forward.1} parent=1 // pred_check_branch
      %26 = sbr.rel (0) target = $region13
    $region12: #{discriminator_forward.1} parent=1 // pred_region
      _
    $region13: #{discriminator_forward.1} parent=1 // pred_fallthru
      _
    // Predicated region
    $region14: #{discriminator_forward.1} parent=1 // pred_check
      _
    $region15: #{discriminator_forward.1} parent=1 // pred_check_branch
      %28 = sbr.rel (0) target = $region17
    $region16: #{discriminator_forward.1} parent=1 // pred_region
      _
    $region17: #{discriminator_forward.1} parent=1 // pred_fallthru
      _
    // Predicated region
    $region18: #{discriminator_forward.1} parent=1 // pred_check
      _
    $region19: #{discriminator_forward.1} parent=1 // pred_check_branch
      %30 = sbr.rel (0) target = $region21
    $region20: #{discriminator_forward.1} parent=1 // pred_region
      _
    $region21: #{discriminator_forward.1} parent=1 // pred_fallthru
      _
    // Predicated region
    $region22: #{discriminator_forward.1} parent=1 // pred_check
      _
    $region23: #{discriminator_forward.1} parent=1 // pred_check_branch
      %32 = sbr.rel (0) target = $region25
    $region24: #{discriminator_forward.1} parent=1 // pred_region
      _
    $region25: #{discriminator_forward.1} parent=1 // pred_fallthru
      _
    // Predicated region
    $region26: #{discriminator_forward.1} parent=1 // pred_check
      _
    $region27: #{discriminator_forward.1} parent=1 // pred_check_branch
      %34 = sbr.rel (0) target = $region29
    $region28: #{discriminator_forward.1} parent=1 // pred_region
      _
    $region29: #{discriminator_forward.1} parent=1 // pred_fallthru
      _
    // Predicated region
    $region30: #{discriminator_forward.1} parent=1 // pred_check
      _
    $region31: #{discriminator_forward.1} parent=1 // pred_check_branch
      %36 = sbr.rel (0) target = $region33
    $region32: #{discriminator_forward.1} parent=1 // pred_region
      _
    $region33: #{discriminator_forward.1} parent=1 // pred_fallthru
      _
    // Predicated region
    $region34: #{discriminator_forward.1} parent=1 // pred_check
      _
    $region35: #{discriminator_forward.1} parent=1 // pred_check_branch
      %38 = sbr.rel (0) target = $region37
    $region36: #{discriminator_forward.1} parent=1 // pred_region
      _
    $region37: #{discriminator_forward.1} parent=1 // pred_fallthru
      _
    // Predicated region
    $region38: #{discriminator_forward.1} parent=1 // pred_check
      _
    $region39: #{discriminator_forward.1} parent=1 // pred_check_branch
      %40 = sbr.rel (0) target = $region41
    $region40: #{discriminator_forward.1} parent=1 // pred_region
      _
    $region41: #{discriminator_forward.1} parent=1 // pred_fallthru
      _
    // Predicated region
    $region42: #{discriminator_forward.1} parent=1 // pred_check
      _
    $region43: #{discriminator_forward.1} parent=1 // pred_check_branch
      %42 = sbr.rel (0) target = $region45
    $region44: #{discriminator_forward.1} parent=1 // pred_region
      _
    $region45: #{discriminator_forward.1} parent=1 // pred_fallthru
      _
    %v44 = vld [vmem:[%s0] sm:$0xff]
    %v45 = vld [vmem:[%s0 + $0x8] sm:$0xff]
    %v46 = vld [vmem:[%s0 + $0x10] sm:$0xff]
    %v47 = vld [vmem:[%s0 + $0x18] sm:$0xff]
    %v48 = vld [vmem:[%s0 + $0x20] sm:$0xff]
    %v49 = vld [vmem:[%s0 + $0x28] sm:$0xff]
    %v50 = vld [vmem:[%s0 + $0x30] sm:$0xff]
    %v51 = vld [vmem:[%s0 + $0x38] sm:$0xff]
    %v52 = vlaneseq
    %v53 = vand.u32 %v52, 127
    %54 = vset.pattern.permute.xlu0 0
    %55 = vperm.xlu0 %54, %v44
    %v56 = vpop.permute.xlu0 %55
    %57 = vset.pattern.permute.xlu0 0
    %58 = vperm.xlu0 %57, %v45
    %v59 = vpop.permute.xlu0 %58
    %60 = vset.pattern.permute.xlu0 0
    %61 = vperm.xlu0 %60, %v46
    %v62 = vpop.permute.xlu0 %61
    %63 = vset.pattern.permute.xlu0 0
    %64 = vperm.xlu0 %63, %v47
    %v65 = vpop.permute.xlu0 %64
    %66 = vset.pattern.permute.xlu0 0
    %67 = vperm.xlu0 %66, %v48
    %v68 = vpop.permute.xlu0 %67
    %69 = vset.pattern.permute.xlu0 0
    %70 = vperm.xlu0 %69, %v49
    %v71 = vpop.permute.xlu0 %70
    %72 = vset.pattern.permute.xlu0 0
    %73 = vperm.xlu0 %72, %v50
    %v74 = vpop.permute.xlu0 %73
    %75 = vset.pattern.permute.xlu0 0
    %76 = vperm.xlu0 %75, %v51
    %v77 = vpop.permute.xlu0 %76
    %vm78 = vcmp.eq.s32.totalorder %v56, %v53
    %vm79 = vcmp.eq.s32.totalorder %v59, %v53
    %vm80 = vcmp.eq.s32.totalorder %v62, %v53
    %vm81 = vcmp.eq.s32.totalorder %v65, %v53
    %vm82 = vcmp.eq.s32.totalorder %v68, %v53
    %vm83 = vcmp.eq.s32.totalorder %v71, %v53
    %vm84 = vcmp.eq.s32.totalorder %v74, %v53
    %vm85 = vcmp.eq.s32.totalorder %v77, %v53
    %v86 = vsel %vm78, 1, 0
    %v87 = vsel %vm79, 1, 0
    %v88 = vsel %vm80, 1, 0
    %v89 = vsel %vm81, 1, 0
    %v90 = vsel %vm82, 1, 0
    %v91 = vsel %vm83, 1, 0
    %v92 = vsel %vm84, 1, 0
    %v93 = vsel %vm85, 1, 0
    %v94 = vcvt.s32.f32 %v86
    %v95 = vcvt.s32.f32 %v87
    %v96 = vcvt.s32.f32 %v88
    %v97 = vcvt.s32.f32 %v89
    %v98 = vcvt.s32.f32 %v90
    %v99 = vcvt.s32.f32 %v91
    %v100 = vcvt.s32.f32 %v92
    %v101 = vcvt.s32.f32 %v93
    %v102 = vld [vmem:[%s1] sm:$0xff]
    %v103 = vld [vmem:[%s1 + $0x8] sm:$0xff]
    %v104 = vld [vmem:[%s1 + $0x10] sm:$0xff]
    %v105 = vld [vmem:[%s1 + $0x18] sm:$0xff]
    %v106 = vld [vmem:[%s2] sm:$0xff]
    %v107 = vld [vmem:[%s2 + $0x8] sm:$0xff]
    %v108 = vld [vmem:[%s2 + $0x10] sm:$0xff]
    %v109 = vld [vmem:[%s2 + $0x18] sm:$0xff]
    %vm110 = vcmask 261120
    %v112 = vsel %vm110, %v102, 0
    %v115 = vsel %vm110, %v103, 0
    %v118 = vsel %vm110, %v104, 0
    %v121 = vsel %vm110, %v105, 0
    %123 = vmatpush.msra.mxu0 0.0
    %124 = vmatpush.msra.mxu0 0.0
    %125 = vmatpush.msra.mxu0 0.0
    %126 = vmatpush.msra.mxu0 0.0
    %127 = vmatpush.msra.mxu0 0.0
    %128 = vmatpush.msra.mxu0 0.0
    %129 = vmatpush.msra.mxu0 0.0
    %130 = vmatpush.msra.mxu0 0.0
    %131 = vmatpush.msra.mxu0 0.0
    %132 = vmatpush.msra.mxu0 0.0
    %133 = vmatpush.msra.mxu0 0.0
    %134 = vmatpush.msra.mxu0 0.0
    %135 = vmatpush.msra.mxu0 %v109
    %136 = vmatpush.msra.mxu0 %v108
    %137 = vmatpush.msra.mxu0 %v107
    %138 = vmatpush.msra.mxu0 %v106
    %139 = vmatmul.f32.gmra.mxu0 %v112
    %v140 = vpop.f32.mrf.mxu0
    %v141 = vadd.f32 0.0, %v140
    %142 = vmatmul.f32.gmra.mxu0 %v115
    %v143 = vpop.f32.mrf.mxu0
    %v144 = vadd.f32 0.0, %v143
    %145 = vmatmul.f32.gmra.mxu0 %v118
    %v146 = vpop.f32.mrf.mxu0
    %v147 = vadd.f32 0.0, %v146
    %148 = vmatmul.f32.gmra.mxu0 %v121
    %v149 = vpop.f32.mrf.mxu0
    %v150 = vadd.f32 0.0, %v149
    %151 = vdwg.mxu0
    %v152 = vld [vmem:[%s3] sm:$0x1]
    %v154 = vperm.slane %v152, 0
    %v157 = vsel %vm110, %v94, 0
    %v160 = vsel %vm110, %v95, 0
    %v163 = vsel %vm110, %v96, 0
    %v166 = vsel %vm110, %v97, 0
    %v169 = vsel %vm110, %v98, 0
    %v172 = vsel %vm110, %v99, 0
    %v175 = vsel %vm110, %v100, 0
    %v178 = vsel %vm110, %v101, 0
    %180 = vmatpush.msra.mxu0 0.0
    %181 = vmatpush.msra.mxu0 0.0
    %182 = vmatpush.msra.mxu0 0.0
    %183 = vmatpush.msra.mxu0 0.0
    %184 = vmatpush.msra.mxu0 0.0
    %185 = vmatpush.msra.mxu0 0.0
    %186 = vmatpush.msra.mxu0 0.0
    %187 = vmatpush.msra.mxu0 0.0
    %188 = vmatpush.msra.mxu0 0.0
    %189 = vmatpush.msra.mxu0 0.0
    %190 = vmatpush.msra.mxu0 0.0
    %191 = vmatpush.msra.mxu0 0.0
    %192 = vmatpush.msra.mxu0 %v150
    %193 = vmatpush.msra.mxu0 %v147
    %194 = vmatpush.msra.mxu0 %v144
    %195 = vmatpush.msra.mxu0 %v141
    %196 = vmatmul.f32.gmra.mxu0 %v157
    %v197 = vpop.f32.mrf.mxu0
    %v198 = vadd.f32 %v154, %v197
    %199 = vmatmul.f32.gmra.mxu0 %v160
    %v200 = vpop.f32.mrf.mxu0
    %v201 = vadd.f32 %v154, %v200
    %202 = vmatmul.f32.gmra.mxu0 %v163
    %v203 = vpop.f32.mrf.mxu0
    %v204 = vadd.f32 %v154, %v203
    %205 = vmatmul.f32.gmra.mxu0 %v166
    %v206 = vpop.f32.mrf.mxu0
    %v207 = vadd.f32 %v154, %v206
    %208 = vmatmul.f32.gmra.mxu0 %v169
    %v209 = vpop.f32.mrf.mxu0
    %v210 = vadd.f32 %v154, %v209
    %211 = vmatmul.f32.gmra.mxu0 %v172
    %v212 = vpop.f32.mrf.mxu0
    %v213 = vadd.f32 %v154, %v212
    %214 = vmatmul.f32.gmra.mxu0 %v175
    %v215 = vpop.f32.mrf.mxu0
    %v216 = vadd.f32 %v154, %v215
    %217 = vmatmul.f32.gmra.mxu0 %v178
    %v218 = vpop.f32.mrf.mxu0
    %v219 = vadd.f32 %v154, %v218
    %220 = vdwg.mxu0
    %v221 = vld [vmem:[%s4] sm:$0xff]
    %v222 = vld [vmem:[%s4 + $0x8] sm:$0xff]
    %v223 = vld [vmem:[%s4 + $0x10] sm:$0xff]
    %v224 = vld [vmem:[%s4 + $0x18] sm:$0xff]
    %v225 = vld [vmem:[%s4 + $0x20] sm:$0xff]
    %v226 = vld [vmem:[%s4 + $0x28] sm:$0xff]
    %v227 = vld [vmem:[%s4 + $0x30] sm:$0xff]
    %v228 = vld [vmem:[%s4 + $0x38] sm:$0xff]
    %v229 = vld [vmem:[%s5] sm:$0x1]
    %v231 = vperm.slane %v229, 0
    %v233 = vld [vmem:[%s6] sm:$0x1]
    %v235 = vperm.slane %v233, 0
    %v236 = vld [vmem:[%s7] sm:$0x1]
    %v238 = vperm.slane %v236, 0
    %v239 = vld [vmem:[%s8] sm:$0x1]
    %v241 = vperm.slane %v239, 0
    %v243 = vxor.u32 %v198, 2147483648
    %v244 = vmul.f32 %v243, 1.442695
    %v245 = vpow.pop %v244
    %v246 = vadd.f32 %v245, 1.0
    %v247 = vrcp.pop %v246
    %v248 = vmul.f32 %v246, %v247
    %v249 = vsub.f32 1.0, %v248
    %v250 = vmul.f32 %v247, %v249
    %v251 = vadd.f32 %v247, %v250
    %vm252 = vweird.f32 %v246
    %vm253 = vweird.f32 %v247
    %vm254 = vmor %vm252, %vm253
    %v255 = vsel %vm254, %v247, %v251
    %v256 = vand.u32 2147483647, %v246
    %vm257 = vcmp.eq.f32.partialorder %v256, 8.507059e+37
    %v258 = vand.u32 %v246, 2147483648
    %v259 = vor.u32 1.1754944e-38, %v258
    %v260 = vsel %vm257, %v259, %v255
    %v261 = vmul.f32 1.0, %v260
    %v262 = vmul.f32 %v261, %v241
    %264 = vrot.lane.b32.xlu0 %v262, 64
    %v265 = vpop.permute.xlu0 %264
    %v267 = vadd.f32 %v198, %v265
    %v268 = vtanh.pop %v267
    %v269 = vsub.f32 1.0, %v261
    %271 = vrot.lane.b32.xlu0 %v268, 96
    %v272 = vpop.permute.xlu0 %271
    %v274 = vmul.f32 %v269, %v272
    %276 = vrot.lane.b32.xlu0 %v274, 96
    %v277 = vpop.permute.xlu0 %276
    %v279 = vsel %vm110, %v277, 0.0
    %v280 = vpack.c.bf16 %v279, %v279
    %v289 = vunpack.c.l.b16 %v221
    %v290 = vunpack.c.h.b16 %v221
    %v291 = vunpack.c.l.b16 %v222
    %v292 = vunpack.c.h.b16 %v222
    %v293 = vunpack.c.l.b16 %v223
    %v294 = vunpack.c.h.b16 %v223
    %v295 = vunpack.c.l.b16 %v224
    %v296 = vunpack.c.h.b16 %v224
    %v297 = vunpack.c.l.b16 %v225
    %v298 = vunpack.c.h.b16 %v225
    %v299 = vunpack.c.l.b16 %v226
    %v300 = vunpack.c.h.b16 %v226
    %v301 = vunpack.c.l.b16 %v227
    %v302 = vunpack.c.h.b16 %v227
    %v303 = vunpack.c.l.b16 %v228
    %v304 = vunpack.c.h.b16 %v228
    %v305 = vpack.c.b16 %v291, %v289
    %v306 = vpack.c.b16 %v292, %v290
    %v307 = vpack.c.b16 %v295, %v293
    %v308 = vpack.c.b16 %v296, %v294
    %v309 = vpack.c.b16 %v299, %v297
    %v310 = vpack.c.b16 %v300, %v298
    %v311 = vpack.c.b16 %v303, %v301
    %v312 = vpack.c.b16 %v304, %v302
    %vm321 = vcmask 523264
    %v323 = vsel %vm321, %v280, 0
    %325 = vmatpush.bf16.msra.mxu0 0
    %326 = vmatpush.bf16.msra.mxu0 0
    %327 = vmatpush.bf16.msra.mxu0 0
    %328 = vmatpush.bf16.msra.mxu0 0
    %329 = vmatpush.bf16.msra.mxu0 %v311
    %330 = vmatpush.bf16.msra.mxu0 %v309
    %331 = vmatpush.bf16.msra.mxu0 %v307
    %332 = vmatpush.bf16.msra.mxu0 %v305
    %333 = vmatmul.bf16.gmra.mxu0 %v323
    %v334 = vpop.f32.mrf.mxu0
    %v335 = vadd.f32 0.0, %v334
    %v336 = vpop.f32.mrf.mxu0
    %337 = vdwg.mxu0
    %338 = vmatpush.bf16.msra.mxu0 0
    %339 = vmatpush.bf16.msra.mxu0 0
    %340 = vmatpush.bf16.msra.mxu0 0
    %341 = vmatpush.bf16.msra.mxu0 0
    %342 = vmatpush.bf16.msra.mxu0 %v312
    %343 = vmatpush.bf16.msra.mxu0 %v310
    %344 = vmatpush.bf16.msra.mxu0 %v308
    %345 = vmatpush.bf16.msra.mxu0 %v306
    %346 = vmatmul.bf16.gmra.mxu0 %v323
    %v347 = vpop.f32.mrf.mxu0
    %v348 = vadd.f32 0.0, %v347
    %v349 = vpop.f32.mrf.mxu0
    %350 = vdwg.mxu0
    %v351 = vadd.f32 %v335, %v231
    %v352 = vxor.u32 %v351, 2147483648
    %v353 = vmul.f32 %v352, 1.442695
    %v354 = vpow.pop %v353
    %v355 = vadd.f32 %v354, 1.0
    %v356 = vrcp.pop %v355
    %v357 = vmul.f32 %v355, %v356
    %v358 = vsub.f32 1.0, %v357
    %v359 = vmul.f32 %v356, %v358
    %v360 = vadd.f32 %v356, %v359
    %vm361 = vweird.f32 %v355
    %vm362 = vweird.f32 %v356
    %vm363 = vmor %vm361, %vm362
    %v364 = vsel %vm363, %v356, %v360
    %v365 = vand.u32 2147483647, %v355
    %vm366 = vcmp.eq.f32.partialorder %v365, 8.507059e+37
    %v367 = vand.u32 %v355, 2147483648
    %v368 = vor.u32 1.1754944e-38, %v367
    %v369 = vsel %vm366, %v368, %v364
    %v370 = vmul.f32 1.0, %v369
    %371 = vrot.lane.b32.xlu0 %v235, 64
    %v372 = vpop.permute.xlu0 %371
    %v374 = vadd.f32 %v335, %v372
    %375 = vrot.lane.b32.xlu0 %v238, 96
    %v376 = vpop.permute.xlu0 %375
    %v378 = vadd.f32 %v335, %v376
    %380 = vrot.lane.b32.xlu0 %v378, 32
    %v381 = vpop.permute.xlu0 %380
    %v383 = vmul.f32 %v370, %v381
    %385 = vrot.lane.b32.xlu0 %v383, 64
    %v386 = vpop.permute.xlu0 %385
    %v388 = vadd.f32 %v374, %v386
    %v389 = vtanh.pop %v388
    %v390 = vsub.f32 1.0, %v370
    %392 = vrot.lane.b32.xlu0 %v389, 96
    %v393 = vpop.permute.xlu0 %392
    %v395 = vmul.f32 %v390, %v393
    %v396 = vmul.f32 %v370, 0.0
    %v397 = vadd.f32 %v395, %v396
    %v398 = vadd.f32 %v201, %v348
    %v399 = vxor.u32 %v398, 2147483648
    %v400 = vmul.f32 %v399, 1.442695
    %v401 = vpow.pop %v400
    %v402 = vadd.f32 %v401, 1.0
    %v403 = vrcp.pop %v402
    %v404 = vmul.f32 %v402, %v403
    %v405 = vsub.f32 1.0, %v404
    %v406 = vmul.f32 %v403, %v405
    %v407 = vadd.f32 %v403, %v406
    %vm408 = vweird.f32 %v402
    %vm409 = vweird.f32 %v403
    %vm410 = vmor %vm408, %vm409
    %v411 = vsel %vm410, %v403, %v407
    %v412 = vand.u32 2147483647, %v402
    %vm413 = vcmp.eq.f32.partialorder %v412, 8.507059e+37
    %v414 = vand.u32 %v402, 2147483648
    %v415 = vor.u32 1.1754944e-38, %v414
    %v416 = vsel %vm413, %v415, %v411
    %v417 = vmul.f32 1.0, %v416
    %418 = vrot.lane.b32.xlu0 %v241, 64
    %v419 = vpop.permute.xlu0 %418
    %v421 = vadd.f32 %v348, %v419
    %423 = vrot.lane.b32.xlu0 %v421, 64
    %v424 = vpop.permute.xlu0 %423
    %v426 = vmul.f32 %v417, %v424
    %428 = vrot.lane.b32.xlu0 %v426, 64
    %v429 = vpop.permute.xlu0 %428
    %v431 = vadd.f32 %v201, %v429
    %v432 = vtanh.pop %v431
    %v433 = vsub.f32 1.0, %v417
    %435 = vrot.lane.b32.xlu0 %v432, 96
    %v436 = vpop.permute.xlu0 %435
    %v438 = vmul.f32 %v433, %v436
    %v439 = vmul.f32 %v417, %v274
    %v440 = vadd.f32 %v438, %v439
    %442 = vrot.lane.b32.xlu0 %v440, 96
    %v443 = vpop.permute.xlu0 %442
    %v445 = vsel %vm110, %v443, %v397
    %v446 = vpack.c.bf16 %v445, %v445
    %v448 = vsel %vm321, %v446, 0
    %450 = vmatpush.bf16.msra.mxu0 0
    %451 = vmatpush.bf16.msra.mxu0 0
    %452 = vmatpush.bf16.msra.mxu0 0
    %453 = vmatpush.bf16.msra.mxu0 0
    %454 = vmatpush.bf16.msra.mxu0 %v311
    %455 = vmatpush.bf16.msra.mxu0 %v309
    %456 = vmatpush.bf16.msra.mxu0 %v307
    %457 = vmatpush.bf16.msra.mxu0 %v305
    %458 = vmatmul.bf16.gmra.mxu0 %v448
    %v459 = vpop.f32.mrf.mxu0
    %v460 = vadd.f32 0.0, %v459
    %v461 = vpop.f32.mrf.mxu0
    %462 = vdwg.mxu0
    %463 = vmatpush.bf16.msra.mxu0 0
    %464 = vmatpush.bf16.msra.mxu0 0
    %465 = vmatpush.bf16.msra.mxu0 0
    %466 = vmatpush.bf16.msra.mxu0 0
    %467 = vmatpush.bf16.msra.mxu0 %v312
    %468 = vmatpush.bf16.msra.mxu0 %v310
    %469 = vmatpush.bf16.msra.mxu0 %v308
    %470 = vmatpush.bf16.msra.mxu0 %v306
    %471 = vmatmul.bf16.gmra.mxu0 %v448
    %v472 = vpop.f32.mrf.mxu0
    %v473 = vadd.f32 0.0, %v472
    %v474 = vpop.f32.mrf.mxu0
    %475 = vdwg.mxu0
    %v476 = vadd.f32 %v460, %v231
    %v477 = vxor.u32 %v476, 2147483648
    %v478 = vmul.f32 %v477, 1.442695
    %v479 = vpow.pop %v478
    %v480 = vadd.f32 %v479, 1.0
    %v481 = vrcp.pop %v480
    %v482 = vmul.f32 %v480, %v481
    %v483 = vsub.f32 1.0, %v482
    %v484 = vmul.f32 %v481, %v483
    %v485 = vadd.f32 %v481, %v484
    %vm486 = vweird.f32 %v480
    %vm487 = vweird.f32 %v481
    %vm488 = vmor %vm486, %vm487
    %v489 = vsel %vm488, %v481, %v485
    %v490 = vand.u32 2147483647, %v480
    %vm491 = vcmp.eq.f32.partialorder %v490, 8.507059e+37
    %v492 = vand.u32 %v480, 2147483648
    %v493 = vor.u32 1.1754944e-38, %v492
    %v494 = vsel %vm491, %v493, %v489
    %v495 = vmul.f32 1.0, %v494
    %v496 = vadd.f32 %v460, %v372
    %v497 = vadd.f32 %v460, %v376
    %499 = vrot.lane.b32.xlu0 %v497, 32
    %v500 = vpop.permute.xlu0 %499
    %v502 = vmul.f32 %v495, %v500
    %504 = vrot.lane.b32.xlu0 %v502, 64
    %v505 = vpop.permute.xlu0 %504
    %v507 = vadd.f32 %v496, %v505
    %v508 = vtanh.pop %v507
    %v509 = vsub.f32 1.0, %v495
    %511 = vrot.lane.b32.xlu0 %v508, 96
    %v512 = vpop.permute.xlu0 %511
    %v514 = vmul.f32 %v509, %v512
    %v515 = vmul.f32 %v495, %v397
    %v516 = vadd.f32 %v514, %v515
    %v517 = vadd.f32 %v204, %v473
    %v518 = vxor.u32 %v517, 2147483648
    %v519 = vmul.f32 %v518, 1.442695
    %v520 = vpow.pop %v519
    %v521 = vadd.f32 %v520, 1.0
    %v522 = vrcp.pop %v521
    %v523 = vmul.f32 %v521, %v522
    %v524 = vsub.f32 1.0, %v523
    %v525 = vmul.f32 %v522, %v524
    %v526 = vadd.f32 %v522, %v525
    %vm527 = vweird.f32 %v521
    %vm528 = vweird.f32 %v522
    %vm529 = vmor %vm527, %vm528
    %v530 = vsel %vm529, %v522, %v526
    %v531 = vand.u32 2147483647, %v521
    %vm532 = vcmp.eq.f32.partialorder %v531, 8.507059e+37
    %v533 = vand.u32 %v521, 2147483648
    %v534 = vor.u32 1.1754944e-38, %v533
    %v535 = vsel %vm532, %v534, %v530
    %v536 = vmul.f32 1.0, %v535
    %v537 = vadd.f32 %v473, %v419
    %539 = vrot.lane.b32.xlu0 %v537, 64
    %v540 = vpop.permute.xlu0 %539
    %v542 = vmul.f32 %v536, %v540
    %544 = vrot.lane.b32.xlu0 %v542, 64
    %v545 = vpop.permute.xlu0 %544
    %v547 = vadd.f32 %v204, %v545
    %v548 = vtanh.pop %v547
    %v549 = vsub.f32 1.0, %v536
    %551 = vrot.lane.b32.xlu0 %v548, 96
    %v552 = vpop.permute.xlu0 %551
    %v554 = vmul.f32 %v549, %v552
    %v555 = vmul.f32 %v536, %v440
    %v556 = vadd.f32 %v554, %v555
    %558 = vrot.lane.b32.xlu0 %v556, 96
    %v559 = vpop.permute.xlu0 %558
    %v561 = vsel %vm110, %v559, %v516
    %v562 = vpack.c.bf16 %v561, %v561
    %v564 = vsel %vm321, %v562, 0
    %566 = vmatpush.bf16.msra.mxu0 0
    %567 = vmatpush.bf16.msra.mxu0 0
    %568 = vmatpush.bf16.msra.mxu0 0
    %569 = vmatpush.bf16.msra.mxu0 0
    %570 = vmatpush.bf16.msra.mxu0 %v311
    %571 = vmatpush.bf16.msra.mxu0 %v309
    %572 = vmatpush.bf16.msra.mxu0 %v307
    %573 = vmatpush.bf16.msra.mxu0 %v305
    %574 = vmatmul.bf16.gmra.mxu0 %v564
    %v575 = vpop.f32.mrf.mxu0
    %v576 = vadd.f32 0.0, %v575
    %v577 = vpop.f32.mrf.mxu0
    %578 = vdwg.mxu0
    %579 = vmatpush.bf16.msra.mxu0 0
    %580 = vmatpush.bf16.msra.mxu0 0
    %581 = vmatpush.bf16.msra.mxu0 0
    %582 = vmatpush.bf16.msra.mxu0 0
    %583 = vmatpush.bf16.msra.mxu0 %v312
    %584 = vmatpush.bf16.msra.mxu0 %v310
    %585 = vmatpush.bf16.msra.mxu0 %v308
    %586 = vmatpush.bf16.msra.mxu0 %v306
    %587 = vmatmul.bf16.gmra.mxu0 %v564
    %v588 = vpop.f32.mrf.mxu0
    %v589 = vadd.f32 0.0, %v588
    %v590 = vpop.f32.mrf.mxu0
    %591 = vdwg.mxu0
    %v592 = vadd.f32 %v576, %v231
    %v593 = vxor.u32 %v592, 2147483648
    %v594 = vmul.f32 %v593, 1.442695
    %v595 = vpow.pop %v594
    %v596 = vadd.f32 %v595, 1.0
    %v597 = vrcp.pop %v596
    %v598 = vmul.f32 %v596, %v597
    %v599 = vsub.f32 1.0, %v598
    %v600 = vmul.f32 %v597, %v599
    %v601 = vadd.f32 %v597, %v600
    %vm602 = vweird.f32 %v596
    %vm603 = vweird.f32 %v597
    %vm604 = vmor %vm602, %vm603
    %v605 = vsel %vm604, %v597, %v601
    %v606 = vand.u32 2147483647, %v596
    %vm607 = vcmp.eq.f32.partialorder %v606, 8.507059e+37
    %v608 = vand.u32 %v596, 2147483648
    %v609 = vor.u32 1.1754944e-38, %v608
    %v610 = vsel %vm607, %v609, %v605
    %v611 = vmul.f32 1.0, %v610
    %v612 = vadd.f32 %v576, %v372
    %v613 = vadd.f32 %v576, %v376
    %615 = vrot.lane.b32.xlu0 %v613, 32
    %v616 = vpop.permute.xlu0 %615
    %v618 = vmul.f32 %v611, %v616
    %620 = vrot.lane.b32.xlu0 %v618, 64
    %v621 = vpop.permute.xlu0 %620
    %v623 = vadd.f32 %v612, %v621
    %v624 = vtanh.pop %v623
    %v625 = vsub.f32 1.0, %v611
    %627 = vrot.lane.b32.xlu0 %v624, 96
    %v628 = vpop.permute.xlu0 %627
    %v630 = vmul.f32 %v625, %v628
    %v631 = vmul.f32 %v611, %v516
    %v632 = vadd.f32 %v630, %v631
    %v633 = vadd.f32 %v207, %v589
    %v634 = vxor.u32 %v633, 2147483648
    %v635 = vmul.f32 %v634, 1.442695
    %v636 = vpow.pop %v635
    %v637 = vadd.f32 %v636, 1.0
    %v638 = vrcp.pop %v637
    %v639 = vmul.f32 %v637, %v638
    %v640 = vsub.f32 1.0, %v639
    %v641 = vmul.f32 %v638, %v640
    %v642 = vadd.f32 %v638, %v641
    %vm643 = vweird.f32 %v637
    %vm644 = vweird.f32 %v638
    %vm645 = vmor %vm643, %vm644
    %v646 = vsel %vm645, %v638, %v642
    %v647 = vand.u32 2147483647, %v637
    %vm648 = vcmp.eq.f32.partialorder %v647, 8.507059e+37
    %v649 = vand.u32 %v637, 2147483648
    %v650 = vor.u32 1.1754944e-38, %v649
    %v651 = vsel %vm648, %v650, %v646
    %v652 = vmul.f32 1.0, %v651
    %v653 = vadd.f32 %v589, %v419
    %655 = vrot.lane.b32.xlu0 %v653, 64
    %v656 = vpop.permute.xlu0 %655
    %v658 = vmul.f32 %v652, %v656
    %660 = vrot.lane.b32.xlu0 %v658, 64
    %v661 = vpop.permute.xlu0 %660
    %v663 = vadd.f32 %v207, %v661
    %v664 = vtanh.pop %v663
    %v665 = vsub.f32 1.0, %v652
    %667 = vrot.lane.b32.xlu0 %v664, 96
    %v668 = vpop.permute.xlu0 %667
    %v670 = vmul.f32 %v665, %v668
    %v671 = vmul.f32 %v652, %v556
    %v672 = vadd.f32 %v670, %v671
    %674 = vrot.lane.b32.xlu0 %v672, 96
    %v675 = vpop.permute.xlu0 %674
    %v677 = vsel %vm110, %v675, %v632
    %v678 = vpack.c.bf16 %v677, %v677
    %v680 = vsel %vm321, %v678, 0
    %682 = vmatpush.bf16.msra.mxu0 0
    %683 = vmatpush.bf16.msra.mxu0 0
    %684 = vmatpush.bf16.msra.mxu0 0
    %685 = vmatpush.bf16.msra.mxu0 0
    %686 = vmatpush.bf16.msra.mxu0 %v311
    %687 = vmatpush.bf16.msra.mxu0 %v309
    %688 = vmatpush.bf16.msra.mxu0 %v307
    %689 = vmatpush.bf16.msra.mxu0 %v305
    %690 = vmatmul.bf16.gmra.mxu0 %v680
    %v691 = vpop.f32.mrf.mxu0
    %v692 = vadd.f32 0.0, %v691
    %v693 = vpop.f32.mrf.mxu0
    %694 = vdwg.mxu0
    %695 = vmatpush.bf16.msra.mxu0 0
    %696 = vmatpush.bf16.msra.mxu0 0
    %697 = vmatpush.bf16.msra.mxu0 0
    %698 = vmatpush.bf16.msra.mxu0 0
    %699 = vmatpush.bf16.msra.mxu0 %v312
    %700 = vmatpush.bf16.msra.mxu0 %v310
    %701 = vmatpush.bf16.msra.mxu0 %v308
    %702 = vmatpush.bf16.msra.mxu0 %v306
    %703 = vmatmul.bf16.gmra.mxu0 %v680
    %v704 = vpop.f32.mrf.mxu0
    %v705 = vadd.f32 0.0, %v704
    %v706 = vpop.f32.mrf.mxu0
    %707 = vdwg.mxu0
    %v708 = vadd.f32 %v692, %v231
    %v709 = vxor.u32 %v708, 2147483648
    %v710 = vmul.f32 %v709, 1.442695
    %v711 = vpow.pop %v710
    %v712 = vadd.f32 %v711, 1.0
    %v713 = vrcp.pop %v712
    %v714 = vmul.f32 %v712, %v713
    %v715 = vsub.f32 1.0, %v714
    %v716 = vmul.f32 %v713, %v715
    %v717 = vadd.f32 %v713, %v716
    %vm718 = vweird.f32 %v712
    %vm719 = vweird.f32 %v713
    %vm720 = vmor %vm718, %vm719
    %v721 = vsel %vm720, %v713, %v717
    %v722 = vand.u32 2147483647, %v712
    %vm723 = vcmp.eq.f32.partialorder %v722, 8.507059e+37
    %v724 = vand.u32 %v712, 2147483648
    %v725 = vor.u32 1.1754944e-38, %v724
    %v726 = vsel %vm723, %v725, %v721
    %v727 = vmul.f32 1.0, %v726
    %v728 = vadd.f32 %v692, %v372
    %v729 = vadd.f32 %v692, %v376
    %731 = vrot.lane.b32.xlu0 %v729, 32
    %v732 = vpop.permute.xlu0 %731
    %v734 = vmul.f32 %v727, %v732
    %736 = vrot.lane.b32.xlu0 %v734, 64
    %v737 = vpop.permute.xlu0 %736
    %v739 = vadd.f32 %v728, %v737
    %v740 = vtanh.pop %v739
    %v741 = vsub.f32 1.0, %v727
    %743 = vrot.lane.b32.xlu0 %v740, 96
    %v744 = vpop.permute.xlu0 %743
    %v746 = vmul.f32 %v741, %v744
    %v747 = vmul.f32 %v727, %v632
    %v748 = vadd.f32 %v746, %v747
    %v749 = vadd.f32 %v210, %v705
    %v750 = vxor.u32 %v749, 2147483648
    %v751 = vmul.f32 %v750, 1.442695
    %v752 = vpow.pop %v751
    %v753 = vadd.f32 %v752, 1.0
    %v754 = vrcp.pop %v753
    %v755 = vmul.f32 %v753, %v754
    %v756 = vsub.f32 1.0, %v755
    %v757 = vmul.f32 %v754, %v756
    %v758 = vadd.f32 %v754, %v757
    %vm759 = vweird.f32 %v753
    %vm760 = vweird.f32 %v754
    %vm761 = vmor %vm759, %vm760
    %v762 = vsel %vm761, %v754, %v758
    %v763 = vand.u32 2147483647, %v753
    %vm764 = vcmp.eq.f32.partialorder %v763, 8.507059e+37
    %v765 = vand.u32 %v753, 2147483648
    %v766 = vor.u32 1.1754944e-38, %v765
    %v767 = vsel %vm764, %v766, %v762
    %v768 = vmul.f32 1.0, %v767
    %v769 = vadd.f32 %v705, %v419
    %771 = vrot.lane.b32.xlu0 %v769, 64
    %v772 = vpop.permute.xlu0 %771
    %v774 = vmul.f32 %v768, %v772
    %776 = vrot.lane.b32.xlu0 %v774, 64
    %v777 = vpop.permute.xlu0 %776
    %v779 = vadd.f32 %v210, %v777
    %v780 = vtanh.pop %v779
    %v781 = vsub.f32 1.0, %v768
    %783 = vrot.lane.b32.xlu0 %v780, 96
    %v784 = vpop.permute.xlu0 %783
    %v786 = vmul.f32 %v781, %v784
    %v787 = vmul.f32 %v768, %v672
    %v788 = vadd.f32 %v786, %v787
    %790 = vrot.lane.b32.xlu0 %v788, 96
    %v791 = vpop.permute.xlu0 %790
    %v793 = vsel %vm110, %v791, %v748
    %v794 = vpack.c.bf16 %v793, %v793
    %v796 = vsel %vm321, %v794, 0
    %798 = vmatpush.bf16.msra.mxu0 0
    %799 = vmatpush.bf16.msra.mxu0 0
    %800 = vmatpush.bf16.msra.mxu0 0
    %801 = vmatpush.bf16.msra.mxu0 0
    %802 = vmatpush.bf16.msra.mxu0 %v311
    %803 = vmatpush.bf16.msra.mxu0 %v309
    %804 = vmatpush.bf16.msra.mxu0 %v307
    %805 = vmatpush.bf16.msra.mxu0 %v305
    %806 = vmatmul.bf16.gmra.mxu0 %v796
    %v807 = vpop.f32.mrf.mxu0
    %v808 = vadd.f32 0.0, %v807
    %v809 = vpop.f32.mrf.mxu0
    %810 = vdwg.mxu0
    %811 = vmatpush.bf16.msra.mxu0 0
    %812 = vmatpush.bf16.msra.mxu0 0
    %813 = vmatpush.bf16.msra.mxu0 0
    %814 = vmatpush.bf16.msra.mxu0 0
    %815 = vmatpush.bf16.msra.mxu0 %v312
    %816 = vmatpush.bf16.msra.mxu0 %v310
    %817 = vmatpush.bf16.msra.mxu0 %v308
    %818 = vmatpush.bf16.msra.mxu0 %v306
    %819 = vmatmul.bf16.gmra.mxu0 %v796
    %v820 = vpop.f32.mrf.mxu0
    %v821 = vadd.f32 0.0, %v820
    %v822 = vpop.f32.mrf.mxu0
    %823 = vdwg.mxu0
    %v824 = vadd.f32 %v808, %v231
    %v825 = vxor.u32 %v824, 2147483648
    %v826 = vmul.f32 %v825, 1.442695
    %v827 = vpow.pop %v826
    %v828 = vadd.f32 %v827, 1.0
    %v829 = vrcp.pop %v828
    %v830 = vmul.f32 %v828, %v829
    %v831 = vsub.f32 1.0, %v830
    %v832 = vmul.f32 %v829, %v831
    %v833 = vadd.f32 %v829, %v832
    %vm834 = vweird.f32 %v828
    %vm835 = vweird.f32 %v829
    %vm836 = vmor %vm834, %vm835
    %v837 = vsel %vm836, %v829, %v833
    %v838 = vand.u32 2147483647, %v828
    %vm839 = vcmp.eq.f32.partialorder %v838, 8.507059e+37
    %v840 = vand.u32 %v828, 2147483648
    %v841 = vor.u32 1.1754944e-38, %v840
    %v842 = vsel %vm839, %v841, %v837
    %v843 = vmul.f32 1.0, %v842
    %v844 = vadd.f32 %v808, %v372
    %v845 = vadd.f32 %v808, %v376
    %847 = vrot.lane.b32.xlu0 %v845, 32
    %v848 = vpop.permute.xlu0 %847
    %v850 = vmul.f32 %v843, %v848
    %852 = vrot.lane.b32.xlu0 %v850, 64
    %v853 = vpop.permute.xlu0 %852
    %v855 = vadd.f32 %v844, %v853
    %v856 = vtanh.pop %v855
    %v857 = vsub.f32 1.0, %v843
    %859 = vrot.lane.b32.xlu0 %v856, 96
    %v860 = vpop.permute.xlu0 %859
    %v862 = vmul.f32 %v857, %v860
    %v863 = vmul.f32 %v843, %v748
    %v864 = vadd.f32 %v862, %v863
    %v865 = vadd.f32 %v213, %v821
    %v866 = vxor.u32 %v865, 2147483648
    %v867 = vmul.f32 %v866, 1.442695
    %v868 = vpow.pop %v867
    %v869 = vadd.f32 %v868, 1.0
    %v870 = vrcp.pop %v869
    %v871 = vmul.f32 %v869, %v870
    %v872 = vsub.f32 1.0, %v871
    %v873 = vmul.f32 %v870, %v872
    %v874 = vadd.f32 %v870, %v873
    %vm875 = vweird.f32 %v869
    %vm876 = vweird.f32 %v870
    %vm877 = vmor %vm875, %vm876
    %v878 = vsel %vm877, %v870, %v874
    %v879 = vand.u32 2147483647, %v869
    %vm880 = vcmp.eq.f32.partialorder %v879, 8.507059e+37
    %v881 = vand.u32 %v869, 2147483648
    %v882 = vor.u32 1.1754944e-38, %v881
    %v883 = vsel %vm880, %v882, %v878
    %v884 = vmul.f32 1.0, %v883
    %v885 = vadd.f32 %v821, %v419
    %887 = vrot.lane.b32.xlu0 %v885, 64
    %v888 = vpop.permute.xlu0 %887
    %v890 = vmul.f32 %v884, %v888
    %892 = vrot.lane.b32.xlu0 %v890, 64
    %v893 = vpop.permute.xlu0 %892
    %v895 = vadd.f32 %v213, %v893
    %v896 = vtanh.pop %v895
    %v897 = vsub.f32 1.0, %v884
    %899 = vrot.lane.b32.xlu0 %v896, 96
    %v900 = vpop.permute.xlu0 %899
    %v902 = vmul.f32 %v897, %v900
    %v903 = vmul.f32 %v884, %v788
    %v904 = vadd.f32 %v902, %v903
    %906 = vrot.lane.b32.xlu0 %v904, 96
    %v907 = vpop.permute.xlu0 %906
    %v909 = vsel %vm110, %v907, %v864
    %v910 = vpack.c.bf16 %v909, %v909
    %v912 = vsel %vm321, %v910, 0
    %914 = vmatpush.bf16.msra.mxu0 0
    %915 = vmatpush.bf16.msra.mxu0 0
    %916 = vmatpush.bf16.msra.mxu0 0
    %917 = vmatpush.bf16.msra.mxu0 0
    %918 = vmatpush.bf16.msra.mxu0 %v311
    %919 = vmatpush.bf16.msra.mxu0 %v309
    %920 = vmatpush.bf16.msra.mxu0 %v307
    %921 = vmatpush.bf16.msra.mxu0 %v305
    %922 = vmatmul.bf16.gmra.mxu0 %v912
    %v923 = vpop.f32.mrf.mxu0
    %v924 = vadd.f32 0.0, %v923
    %v925 = vpop.f32.mrf.mxu0
    %926 = vdwg.mxu0
    %927 = vmatpush.bf16.msra.mxu0 0
    %928 = vmatpush.bf16.msra.mxu0 0
    %929 = vmatpush.bf16.msra.mxu0 0
    %930 = vmatpush.bf16.msra.mxu0 0
    %931 = vmatpush.bf16.msra.mxu0 %v312
    %932 = vmatpush.bf16.msra.mxu0 %v310
    %933 = vmatpush.bf16.msra.mxu0 %v308
    %934 = vmatpush.bf16.msra.mxu0 %v306
    %935 = vmatmul.bf16.gmra.mxu0 %v912
    %v936 = vpop.f32.mrf.mxu0
    %v937 = vadd.f32 0.0, %v936
    %v938 = vpop.f32.mrf.mxu0
    %939 = vdwg.mxu0
    %v940 = vadd.f32 %v924, %v231
    %v941 = vxor.u32 %v940, 2147483648
    %v942 = vmul.f32 %v941, 1.442695
    %v943 = vpow.pop %v942
    %v944 = vadd.f32 %v943, 1.0
    %v945 = vrcp.pop %v944
    %v946 = vmul.f32 %v944, %v945
    %v947 = vsub.f32 1.0, %v946
    %v948 = vmul.f32 %v945, %v947
    %v949 = vadd.f32 %v945, %v948
    %vm950 = vweird.f32 %v944
    %vm951 = vweird.f32 %v945
    %vm952 = vmor %vm950, %vm951
    %v953 = vsel %vm952, %v945, %v949
    %v954 = vand.u32 2147483647, %v944
    %vm955 = vcmp.eq.f32.partialorder %v954, 8.507059e+37
    %v956 = vand.u32 %v944, 2147483648
    %v957 = vor.u32 1.1754944e-38, %v956
    %v958 = vsel %vm955, %v957, %v953
    %v959 = vmul.f32 1.0, %v958
    %v960 = vadd.f32 %v924, %v372
    %v961 = vadd.f32 %v924, %v376
    %963 = vrot.lane.b32.xlu0 %v961, 32
    %v964 = vpop.permute.xlu0 %963
    %v966 = vmul.f32 %v959, %v964
    %968 = vrot.lane.b32.xlu0 %v966, 64
    %v969 = vpop.permute.xlu0 %968
    %v971 = vadd.f32 %v960, %v969
    %v972 = vtanh.pop %v971
    %v973 = vsub.f32 1.0, %v959
    %975 = vrot.lane.b32.xlu0 %v972, 96
    %v976 = vpop.permute.xlu0 %975
    %v978 = vmul.f32 %v973, %v976
    %v979 = vmul.f32 %v959, %v864
    %v980 = vadd.f32 %v978, %v979
    %v981 = vadd.f32 %v216, %v937
    %v982 = vxor.u32 %v981, 2147483648
    %v983 = vmul.f32 %v982, 1.442695
    %v984 = vpow.pop %v983
    %v985 = vadd.f32 %v984, 1.0
    %v986 = vrcp.pop %v985
    %v987 = vmul.f32 %v985, %v986
    %v988 = vsub.f32 1.0, %v987
    %v989 = vmul.f32 %v986, %v988
    %v990 = vadd.f32 %v986, %v989
    %vm991 = vweird.f32 %v985
    %vm992 = vweird.f32 %v986
    %vm993 = vmor %vm991, %vm992
    %v994 = vsel %vm993, %v986, %v990
    %v995 = vand.u32 2147483647, %v985
    %vm996 = vcmp.eq.f32.partialorder %v995, 8.507059e+37
    %v997 = vand.u32 %v985, 2147483648
    %v998 = vor.u32 1.1754944e-38, %v997
    %v999 = vsel %vm996, %v998, %v994
    %v1000 = vmul.f32 1.0, %v999
    %v1001 = vadd.f32 %v937, %v419
    %1003 = vrot.lane.b32.xlu0 %v1001, 64
    %v1004 = vpop.permute.xlu0 %1003
    %v1006 = vmul.f32 %v1000, %v1004
    %1008 = vrot.lane.b32.xlu0 %v1006, 64
    %v1009 = vpop.permute.xlu0 %1008
    %v1011 = vadd.f32 %v216, %v1009
    %v1012 = vtanh.pop %v1011
    %v1013 = vsub.f32 1.0, %v1000
    %1015 = vrot.lane.b32.xlu0 %v1012, 96
    %v1016 = vpop.permute.xlu0 %1015
    %v1018 = vmul.f32 %v1013, %v1016
    %v1019 = vmul.f32 %v1000, %v904
    %v1020 = vadd.f32 %v1018, %v1019
    %1022 = vrot.lane.b32.xlu0 %v1020, 96
    %v1023 = vpop.permute.xlu0 %1022
    %v1025 = vsel %vm110, %v1023, %v980
    %v1026 = vpack.c.bf16 %v1025, %v1025
    %v1028 = vsel %vm321, %v1026, 0
    %1030 = vmatpush.bf16.msra.mxu0 0
    %1031 = vmatpush.bf16.msra.mxu0 0
    %1032 = vmatpush.bf16.msra.mxu0 0
    %1033 = vmatpush.bf16.msra.mxu0 0
    %1034 = vmatpush.bf16.msra.mxu0 %v311
    %1035 = vmatpush.bf16.msra.mxu0 %v309
    %1036 = vmatpush.bf16.msra.mxu0 %v307
    %1037 = vmatpush.bf16.msra.mxu0 %v305
    %1038 = vmatmul.bf16.gmra.mxu0 %v1028
    %v1039 = vpop.f32.mrf.mxu0
    %v1040 = vadd.f32 0.0, %v1039
    %v1041 = vpop.f32.mrf.mxu0
    %1042 = vdwg.mxu0
    %1043 = vmatpush.bf16.msra.mxu0 0
    %1044 = vmatpush.bf16.msra.mxu0 0
    %1045 = vmatpush.bf16.msra.mxu0 0
    %1046 = vmatpush.bf16.msra.mxu0 0
    %1047 = vmatpush.bf16.msra.mxu0 %v312
    %1048 = vmatpush.bf16.msra.mxu0 %v310
    %1049 = vmatpush.bf16.msra.mxu0 %v308
    %1050 = vmatpush.bf16.msra.mxu0 %v306
    %1051 = vmatmul.bf16.gmra.mxu0 %v1028
    %v1052 = vpop.f32.mrf.mxu0
    %v1053 = vadd.f32 0.0, %v1052
    %v1054 = vpop.f32.mrf.mxu0
    %1055 = vdwg.mxu0
    %v1056 = vadd.f32 %v1040, %v231
    %v1057 = vxor.u32 %v1056, 2147483648
    %v1058 = vmul.f32 %v1057, 1.442695
    %v1059 = vpow.pop %v1058
    %v1060 = vadd.f32 %v1059, 1.0
    %v1061 = vrcp.pop %v1060
    %v1062 = vmul.f32 %v1060, %v1061
    %v1063 = vsub.f32 1.0, %v1062
    %v1064 = vmul.f32 %v1061, %v1063
    %v1065 = vadd.f32 %v1061, %v1064
    %vm1066 = vweird.f32 %v1060
    %vm1067 = vweird.f32 %v1061
    %vm1068 = vmor %vm1066, %vm1067
    %v1069 = vsel %vm1068, %v1061, %v1065
    %v1070 = vand.u32 2147483647, %v1060
    %vm1071 = vcmp.eq.f32.partialorder %v1070, 8.507059e+37
    %v1072 = vand.u32 %v1060, 2147483648
    %v1073 = vor.u32 1.1754944e-38, %v1072
    %v1074 = vsel %vm1071, %v1073, %v1069
    %v1075 = vmul.f32 1.0, %v1074
    %v1076 = vadd.f32 %v1040, %v372
    %v1077 = vadd.f32 %v1040, %v376
    %1079 = vrot.lane.b32.xlu0 %v1077, 32
    %v1080 = vpop.permute.xlu0 %1079
    %v1082 = vmul.f32 %v1075, %v1080
    %1084 = vrot.lane.b32.xlu0 %v1082, 64
    %v1085 = vpop.permute.xlu0 %1084
    %v1087 = vadd.f32 %v1076, %v1085
    %v1088 = vtanh.pop %v1087
    %v1089 = vsub.f32 1.0, %v1075
    %1091 = vrot.lane.b32.xlu0 %v1088, 96
    %v1092 = vpop.permute.xlu0 %1091
    %v1094 = vmul.f32 %v1089, %v1092
    %v1095 = vmul.f32 %v1075, %v980
    %v1096 = vadd.f32 %v1094, %v1095
    %v1097 = vadd.f32 %v219, %v1053
    %v1098 = vxor.u32 %v1097, 2147483648
    %v1099 = vmul.f32 %v1098, 1.442695
    %v1100 = vpow.pop %v1099
    %v1101 = vadd.f32 %v1100, 1.0
    %v1102 = vrcp.pop %v1101
    %v1103 = vmul.f32 %v1101, %v1102
    %v1104 = vsub.f32 1.0, %v1103
    %v1105 = vmul.f32 %v1102, %v1104
    %v1106 = vadd.f32 %v1102, %v1105
    %vm1107 = vweird.f32 %v1101
    %vm1108 = vweird.f32 %v1102
    %vm1109 = vmor %vm1107, %vm1108
    %v1110 = vsel %vm1109, %v1102, %v1106
    %v1111 = vand.u32 2147483647, %v1101
    %vm1112 = vcmp.eq.f32.partialorder %v1111, 8.507059e+37
    %v1113 = vand.u32 %v1101, 2147483648
    %v1114 = vor.u32 1.1754944e-38, %v1113
    %v1115 = vsel %vm1112, %v1114, %v1110
    %v1116 = vmul.f32 1.0, %v1115
    %v1117 = vadd.f32 %v1053, %v419
    %1119 = vrot.lane.b32.xlu0 %v1117, 64
    %v1120 = vpop.permute.xlu0 %1119
    %v1122 = vmul.f32 %v1116, %v1120
    %1124 = vrot.lane.b32.xlu0 %v1122, 64
    %v1125 = vpop.permute.xlu0 %1124
    %v1127 = vadd.f32 %v219, %v1125
    %v1128 = vtanh.pop %v1127
    %v1129 = vsub.f32 1.0, %v1116
    %1131 = vrot.lane.b32.xlu0 %v1128, 96
    %v1132 = vpop.permute.xlu0 %1131
    %v1134 = vmul.f32 %v1129, %v1132
    %v1135 = vmul.f32 %v1116, %v1020
    %v1136 = vadd.f32 %v1134, %v1135
    %1138 = vrot.lane.b32.xlu0 %v1136, 96
    %v1139 = vpop.permute.xlu0 %1138
    %v1141 = vsel %vm110, %v1139, %v1096
    %v1142 = vpack.c.bf16 %v1141, %v1141
    %v1144 = vsel %vm321, %v1142, 0
    %1146 = vmatpush.bf16.msra.mxu0 0
    %1147 = vmatpush.bf16.msra.mxu0 0
    %1148 = vmatpush.bf16.msra.mxu0 0
    %1149 = vmatpush.bf16.msra.mxu0 0
    %1150 = vmatpush.bf16.msra.mxu0 %v311
    %1151 = vmatpush.bf16.msra.mxu0 %v309
    %1152 = vmatpush.bf16.msra.mxu0 %v307
    %1153 = vmatpush.bf16.msra.mxu0 %v305
    %1154 = vmatmul.bf16.gmra.mxu0 %v1144
    %v1155 = vpop.f32.mrf.mxu0
    %v1156 = vadd.f32 0.0, %v1155
    %v1157 = vpop.f32.mrf.mxu0
    %1158 = vdwg.mxu0
    %v1159 = vadd.f32 %v1156, %v231
    %v1160 = vxor.u32 %v1159, 2147483648
    %v1161 = vmul.f32 %v1160, 1.442695
    %v1162 = vpow.pop %v1161
    %v1163 = vadd.f32 %v1162, 1.0
    %v1164 = vrcp.pop %v1163
    %v1165 = vmul.f32 %v1163, %v1164
    %v1166 = vsub.f32 1.0, %v1165
    %v1167 = vmul.f32 %v1164, %v1166
    %v1168 = vadd.f32 %v1164, %v1167
    %vm1169 = vweird.f32 %v1163
    %vm1170 = vweird.f32 %v1164
    %vm1171 = vmor %vm1169, %vm1170
    %v1172 = vsel %vm1171, %v1164, %v1168
    %v1173 = vand.u32 2147483647, %v1163
    %vm1174 = vcmp.eq.f32.partialorder %v1173, 8.507059e+37
    %v1175 = vand.u32 %v1163, 2147483648
    %v1176 = vor.u32 1.1754944e-38, %v1175
    %v1177 = vsel %vm1174, %v1176, %v1172
    %v1178 = vmul.f32 1.0, %v1177
    %v1179 = vadd.f32 %v1156, %v372
    %v1180 = vadd.f32 %v1156, %v376
    %1182 = vrot.lane.b32.xlu0 %v1180, 32
    %v1183 = vpop.permute.xlu0 %1182
    %v1185 = vmul.f32 %v1178, %v1183
    %1187 = vrot.lane.b32.xlu0 %v1185, 64
    %v1188 = vpop.permute.xlu0 %1187
    %v1190 = vadd.f32 %v1179, %v1188
    %v1191 = vtanh.pop %v1190
    %v1192 = vsub.f32 1.0, %v1178
    %1194 = vrot.lane.b32.xlu0 %v1191, 96
    %v1195 = vpop.permute.xlu0 %1194
    %v1197 = vmul.f32 %v1192, %v1195
    %v1198 = vmul.f32 %v1178, %v1096
    %v1199 = vadd.f32 %v1197, %v1198
    %v1200 = vld [vmem:[%s9] sm:$0x1]
    %v1202 = vperm.slane %v1200, 0
    %1203 = vrot.lane.b32.xlu0 %v1202, 32
    %v1204 = vpop.permute.xlu0 %1203
    %v1206 = vmul.f32 %v1199, %v1204
    %1208 = vrot.lane.b32.xlu0 %v1206, 96
    %v1209 = vpop.permute.xlu0 %1208
    %v1211 = vsel %vm110, %v1209, 0.0
    %1212 = vadd.xlane.f32.xlu0 %v1211
    %v1213 = vpop.xlane.xlu0 %1212
    %v1214 = vld [vmem:[#allocation2] sm:$0x1]
    %v1216 = vperm.slane %v1214, 0
    %v1218 = vadd.f32 %v1213, %v1216
    %v1219 = vmax.f32 %v1218, 0.0
    %v1220 = vmul.f32 %v1218, 0.9
    %v1221 = vsub.f32 %v1219, %v1220
    %v1222 = vand.u32 2147483647, %v1218
    %v1223 = vsub.f32 0.0, %v1222
    %v1224 = vmul.f32 %v1223, 1.442695
    %v1225 = vpow.pop %v1224
    %v1226 = vadd.f32 %v1225, 1.0
    %v1227 = vlog2.pop %v1226
    %v1228 = vmul.f32 %v1227, 0.6931472
    %v1229 = vadd.f32 %v1221, %v1228
    %vm1230 = vcmask 7168
    %v1231 = vsel %vm1230, %v1229, 0.0
    %1232 = vadd.xlane.f32.xlu0 %v1231
    %v1233 = vpop.xlane.xlu0 %1232
    %v1234 = vrot.slane %v1233, 4
    %v1235 = vadd.f32 %v1233, %v1234
    %v1236 = vrot.slane %v1235, 2
    %v1237 = vadd.f32 %v1235, %v1236
    %v1238 = vrot.slane %v1237, 1
    %v1239 = vadd.f32 %v1237, %v1238
    %s1240 = vtos %v1239
    %v1241 = vstv %s1240
    %v1242 = vrcp.pop 8.0
    %v1243 = vmul.f32 8.0, %v1242
    %v1244 = vsub.f32 1.0, %v1243
    %v1245 = vmul.f32 %v1242, %v1244
    %v1246 = vadd.f32 %v1242, %v1245
    %vm1247 = vweird.f32 %v1242
    %v1248 = vsel %vm1247, %v1242, %v1246
    %v1249 = vmul.f32 %v1241, %v1248
    %vm1250 = vcmask 0
    %1251 = vst.msk [vmem:[#allocation3] sm:$0x1] %vm1250, %v1249
    %v1252 = vxor.u32 %v1218, 2147483648
    %v1253 = vmul.f32 %v1252, 1.442695
    %v1254 = vpow.pop %v1253
    %v1255 = vadd.f32 %v1254, 1.0
    %v1256 = vrcp.pop %v1255
    %v1257 = vmul.f32 %v1255, %v1256
    %v1258 = vsub.f32 1.0, %v1257
    %v1259 = vmul.f32 %v1256, %v1258
    %v1260 = vadd.f32 %v1256, %v1259
    %vm1261 = vweird.f32 %v1255
    %vm1262 = vweird.f32 %v1256
    %vm1263 = vmor %vm1261, %vm1262
    %v1264 = vsel %vm1263, %v1256, %v1260
    %v1265 = vand.u32 2147483647, %v1255
    %vm1266 = vcmp.eq.f32.partialorder %v1265, 8.507059e+37
    %v1267 = vand.u32 %v1255, 2147483648
    %v1268 = vor.u32 1.1754944e-38, %v1267
    %v1269 = vsel %vm1266, %v1268, %v1264
    %v1270 = vmul.f32 1.0, %v1269
    %1271 = vst.msk [vmem:[%s12] sm:$0xff] %vm1230, %v1270
    // Predicated region
    $region46: #{discriminator_forward.1} parent=1 // pred_check
      _
    $region47: #{discriminator_forward.1} parent=1 // pred_check_branch
      %1273 = sbr.rel (0) target = $region49
    $region48: #{discriminator_forward.1} parent=1 // pred_region
      %1275 = vsyncadd [#allocation4], 0
      %s1277 = sshll.u32 [#allocation3], 4
      %s1278 = int_to_ptr.vmem [resolvable:$true] %s1277
      %s1279 = sshll.u32 %s11, 4
      %s1280 = int_to_ptr.hbm [resolvable:$true] %s1279
      %1282 = dma.vmem_to_hbm [thread:$0]  %s1278, 16, %s1280, [#allocation4]
    $region49: #{discriminator_forward.1} parent=1 // pred_fallthru
      _
    // Predicated region
    $region50: #{discriminator_forward.1} parent=1 // pred_check
      _
    $region51: #{discriminator_forward.1} parent=1 // pred_check_branch
      %1284 = sbr.rel (0) target = $region53
    $region52: #{discriminator_forward.1} parent=1 // pred_region
      _
    $region53: #{discriminator_forward.1} parent=1 // pred_fallthru
      _
    // Predicated region
    $region54: #{discriminator_forward.1} parent=1 // pred_check
      _
    $region55: #{discriminator_forward.1} parent=1 // pred_check_branch
      %1286 = sbr.rel (0) target = $region57
    $region56: #{discriminator_forward.1} parent=1 // pred_region
      %1288 = dma.done [#allocation4], 16
    $region57: #{discriminator_forward.1} parent=1 // pred_fallthru
      _
    // Predicated region
    $region58: #{discriminator_forward.1} parent=1 // pred_check
      _
    $region59: #{discriminator_forward.1} parent=1 // pred_check_branch
      %1290 = sbr.rel (0) target = $region61
    $region60: #{discriminator_forward.1} parent=1 // pred_region
      _
    $region61: #{discriminator_forward.1} parent=1 // pred_fallthru
      _
    %1291 = vsyncpa [#allocation4], 1

</llo_original>
